<compile_context>
chip_gen: v6e
topology: v6e:2x2x1
jax: 0.10.0
libtpu: 0.0.40
codegen_flags: <defaults>
</compile_context>

<pallas_src>
import functools

import jax
import jax.numpy as jnp
from jax.experimental import pallas as pl
from jax.experimental.pallas import tpu as pltpu

# ------------------------- config (small, deterministic) -------------------------
B = 2
IN_CHANNELS = 16
IMAGE_SIZE = 64                  # divisible by 8 (VAE constraint in the module)
LATENT = IMAGE_SIZE // 8         # 8 -> x is the (B, 16, 8, 8) VAE latent
PATCH = 2
K_TOKENS = 8                     # self.k
HIDDEN = 32                      # encoder_hidden_size
CODEBOOK = 64                    # quantizer codebook size
PATCH_DIM = IN_CHANNELS * PATCH * PATCH   # 64
L_IMG = (LATENT // PATCH) ** 2            # 16 image tokens
BK = B * K_TOKENS                         # batch folded into rows: query rows
BL = B * L_IMG                            # batch folded into rows: image-token rows
LANE = 128                                # fused-output splits land on this boundary
SCALE = 1.0 / (HIDDEN ** 0.5)

# ------------- row indices into the single consolidated (80, 128) f32 table -------------
R_B_PATCH_ENC = 0        # enc patch bias (+ folded timestep MLP output)
R_B_PATCH_DEC = 1
R_LN_ENC_KV = 2          # LN rows: gamma at row, beta at row+1
R_LN_ENC_H = 4
R_LN_DEC_X = 6
R_LN_DEC_H = 8
R_LN_DEC_F = 10
R_B_K_ENC = 12
R_B_V_ENC = 13
R_B_Q_DEC = 14           # scale folded
R_B_O_ENC = 15
R_B_UP_ENC = 16
R_B_DN_ENC = 17
R_B_K_DEC = 18
R_B_V_DEC = 19
R_B_O_DEC = 20
R_B_UP_DEC = 21
R_B_DN_DEC = 22
R_B_FINAL = 23
R_CB_SQ = 24
R_MASK_ENC = 32          # (BK, BL) block-diagonal additive mask (0 / -1e9)
R_MASK_DEC = 48          # (BL, BK)
NUM_VEC_ROWS = R_MASK_DEC + BL   # 80


# ------------------------------ fused Pallas kernel -------------------------------
def _fused_forward_kernel(patches_ref, wpatch_ref, wkvq_ref, wo_ref, wup_ref,
                          wdn_ref, cbkv_ref, wfin_ref, cb_ref, qconst_ref,
                          vecs_ref, ids_ref, ori_ref, *rest, recon):
    pred_ref = rest[0] if recon else None
    D = HIDDEN
    bf16 = jnp.bfloat16

    def vec(row, n=D):
        return vecs_ref[row:row + 1, :n]                     # (1, n) f32

    def mm(x, w):
        return jnp.dot(x.astype(bf16), w.astype(bf16),
                       preferred_element_type=jnp.float32)

    def mm_nt(a, b):                                         # (M, D) x (N, D) -> (M, N)
        return jax.lax.dot_general(a.astype(bf16), b.astype(bf16),
                                   dimension_numbers=(((1,), (1,)), ((), ())),
                                   preferred_element_type=jnp.float32)

    def ln(x, row):                                          # gamma at row, beta at row+1
        mu = jnp.mean(x, axis=-1, keepdims=True)
        var = jnp.mean((x - mu) ** 2, axis=-1, keepdims=True)
        return (x - mu) * jax.lax.rsqrt(var + 1e-5) * vec(row) + vec(row + 1)

    def softmax_rows(s):
        s = s - jnp.max(s, axis=-1, keepdims=True)
        p = jnp.exp(s)
        return p * pl.reciprocal(jnp.sum(p, axis=-1, keepdims=True), approx=True)

    # ---- shared patch embedding: enc & dec fused into one matmul (128-lane groups) ----
    tok_all = mm(patches_ref[...], wpatch_ref[...])          # (BL, 2*LANE)
    tok_enc = tok_all[:, :D] + vec(R_B_PATCH_ENC)            # timestep MLP folded in bias
    tok_dec = tok_all[:, LANE:LANE + D] + vec(R_B_PATCH_DEC)

    # ---- fused projection: enc-K | enc-V | dec-Q in ONE MXU round trip ----
    kv_ln = ln(tok_enc, R_LN_ENC_KV)
    x_ln = ln(tok_dec, R_LN_DEC_X)
    proj = mm(jnp.concatenate([kv_ln, x_ln], axis=0), wkvq_ref[...])   # (2*BL, 3*LANE)
    kh = proj[:BL, :D] + vec(R_B_K_ENC)
    vh = proj[:BL, LANE:LANE + D] + vec(R_B_V_ENC)
    dq = proj[BL:, 2 * LANE:2 * LANE + D] + vec(R_B_Q_DEC)             # scale pre-folded

    # ---- encoder cross-attention (LN'd/projected queries are pack-time constants) ----
    q_tok = qconst_ref[0]                                    # (BK, D) residual stream
    qh = qconst_ref[1]                                       # (BK, D) pre-projected, scaled
    s = mm_nt(qh, kh) + vecs_ref[R_MASK_ENC:R_MASK_ENC + BK, :BL]      # block-diag mask
    att = mm(softmax_rows(s), vh)
    h = q_tok + mm(att, wo_ref[0]) + vec(R_B_O_ENC)
    # TODO(synk): tanh-approx GELU; torch nn.GELU default is exact erf.
    m = jax.nn.gelu(mm(ln(h, R_LN_ENC_H), wup_ref[0]) + vec(R_B_UP_ENC, 4 * D),
                    approximate=True)
    h = h + mm(m, wdn_ref[0]) + vec(R_B_DN_ENC)              # (BK, D) ori hidden states
    ori_ref[...] = h

    # ---- vector quantizer (f32 distances for exact id parity) ----
    hcb = jax.lax.dot_general(h, cb_ref[...],
                              dimension_numbers=(((1,), (1,)), ((), ())),
                              preferred_element_type=jnp.float32)      # (BK, V)
    d2 = vec(R_CB_SQ, CODEBOOK) - 2.0 * hcb                  # ||h||^2 dropped: argmin same
    dmin = jnp.min(d2, axis=-1, keepdims=True)
    iota = jax.lax.broadcasted_iota(jnp.int32, d2.shape, 1)
    ids = jnp.min(jnp.where(d2 <= dmin, iota, CODEBOOK), axis=-1, keepdims=True)
    ids_ref[...] = ids                                       # (BK, 1) int32

    if not recon:
        return

    # ---- frozen-DiT decoder: quant -> LN -> K/V proj pre-folded into cbkv table ----
    onehot = (iota == ids).astype(bf16)                      # (BK, V)
    dkv = mm(onehot, cbkv_ref[...])                          # (BK, 2*LANE)
    dk = dkv[:, :D] + vec(R_B_K_DEC)
    dv = dkv[:, LANE:LANE + D] + vec(R_B_V_DEC)
    s = mm_nt(dq, dk) + vecs_ref[R_MASK_DEC:R_MASK_DEC + BL, :BK]
    datt = mm(softmax_rows(s), dv)
    hd = tok_dec + mm(datt, wo_ref[1]) + vec(R_B_O_DEC)
    m = jax.nn.gelu(mm(ln(hd, R_LN_DEC_H), wup_ref[1]) + vec(R_B_UP_DEC, 4 * D),
                    approximate=True)
    hd = hd + mm(m, wdn_ref[1]) + vec(R_B_DN_DEC)
    pred_ref[...] = mm(ln(hd, R_LN_DEC_F), wfin_ref[...]) + vec(R_B_FINAL, PATCH_DIM)


# --------------------------------- JAX glue ---------------------------------------
def patchify(x, p):
    Bn, C, H, W = x.shape
    x = x.reshape(Bn, C, H // p, p, W // p, p)
    x = x.transpose(0, 2, 4, 1, 3, 5)
    return x.reshape(Bn, (H // p) * (W // p), C * p * p)


def unpatchify(tokens, C, H, W, p):
    Bn, L, _ = tokens.shape
    x = tokens.reshape(Bn, H // p, W // p, C, p, p)
    x = x.transpose(0, 3, 1, 4, 2, 5)
    return x.reshape(Bn, C, H, W)


def timestep_embedding(t, dim):
    half = dim // 2
    freqs = jnp.exp(-jnp.log(10000.0) * jnp.arange(half, dtype=jnp.float32) / half)
    args = t[:, None].astype(jnp.float32) * freqs[None, :]
    return jnp.concatenate([jnp.cos(args), jnp.sin(args)], axis=-1)


def init_params(key):
    D = HIDDEN
    pd = PATCH_DIM
    shapes = {
        # encoder (Qformer-style surrogate)
        "enc_patch_w": (pd, D), "enc_patch_b": (D,),
        "enc_t_w1": (D, D), "enc_t_b1": (D,),
        "enc_t_w2": (D, D), "enc_t_b2": (D,),
        "enc_queries": (K_TOKENS, D),
        "enc_lnq_g": (D,), "enc_lnq_b": (D,),
        "enc_lnkv_g": (D,), "enc_lnkv_b": (D,),
        "enc_wq": (D, D), "enc_bq": (D,),
        "enc_wk": (D, D), "enc_bk": (D,),
        "enc_wv": (D, D), "enc_bv": (D,),
        "enc_wo": (D, D), "enc_bo": (D,),
        "enc_lnm_g": (D,), "enc_lnm_b": (D,),
        "enc_m_w1": (D, 4 * D), "enc_m_b1": (4 * D,),
        "enc_m_w2": (4 * D, D), "enc_m_b2": (D,),
        "codebook": (CODEBOOK, D),
        # decoder (frozen DiT surrogate)
        "dec_patch_w": (pd, D), "dec_patch_b": (D,),
        "dec_ln1_g": (D,), "dec_ln1_b": (D,),
        "dec_lnc_g": (D,), "dec_lnc_b": (D,),
        "dec_wq": (D, D), "dec_bq": (D,),
        "dec_wk": (D, D), "dec_bk": (D,),
        "dec_wv": (D, D), "dec_bv": (D,),
        "dec_wo": (D, D), "dec_bo": (D,),
        "dec_ln2_g": (D,), "dec_ln2_b": (D,),
        "dec_m_w1": (D, 4 * D), "dec_m_b1": (4 * D,),
        "dec_m_w2": (4 * D, D), "dec_m_b2": (D,),
        "dec_lnf_g": (D,), "dec_lnf_b": (D,),
        "dec_final_w": (D, pd), "dec_final_b": (pd,),
    }
    params = {}
    keys = jax.random.split(key, len(shapes))
    for (name, shp), k in zip(shapes.items(), keys):
        if name.endswith("_g"):
            params[name] = jnp.ones(shp, jnp.float32)
        elif name.endswith("_b"):
            params[name] = jnp.zeros(shp, jnp.float32)
        else:
            params[name] = jax.random.normal(k, shp, dtype=jnp.float32) * 0.02
    return params


def pack_params(p):
    """Pre-pack parameters ONCE: fused/padded projections, precomputed constant
    query path, LN'd-codebook KV table, folded timestep MLP + attention scale, and
    ONE consolidated (rows, 128) table for all small f32 vectors and masks."""
    bf16 = jnp.bfloat16
    D = HIDDEN

    def _ln(x, g, b, eps=1e-5):
        mu = jnp.mean(x, axis=-1, keepdims=True)
        var = jnp.mean((x - mu) ** 2, axis=-1, keepdims=True)
        return (x - mu) * jax.lax.rsqrt(var + eps) * g + b

    # k_batch = ones(B)*(k-1) is a compile-time constant -> run the timestep MLP once
    # here (f32) and fold the result into the encoder patch-embed bias.
    temb = timestep_embedding(jnp.full((1,), K_TOKENS - 1, jnp.float32), D)
    t = jax.nn.silu(temb @ p["enc_t_w1"] + p["enc_t_b1"])
    t_final = (t @ p["enc_t_w2"] + p["enc_t_b2"])[0]                  # (D,)

    # learned queries: LN + Q projection (+ scale, bias) are input independent.
    q_ln = _ln(p["enc_queries"], p["enc_lnq_g"], p["enc_lnq_b"])
    qh = (q_ln @ p["enc_wq"] + p["enc_bq"]) * SCALE
    qconst = jnp.stack([jnp.tile(p["enc_queries"], (B, 1)),
                        jnp.tile(qh, (B, 1))])                        # (2, BK, D)

    # frozen decoder: LN(codebook) @ [Wk | Wv] is constant -> (V, 2*LANE) table.
    cb_ln = _ln(p["codebook"], p["dec_lnc_g"], p["dec_lnc_b"])
    cbkv = jnp.zeros((CODEBOOK, 2 * LANE), jnp.float32)
    cbkv = cbkv.at[:, :D].set(cb_ln @ p["dec_wk"])
    cbkv = cbkv.at[:, LANE:LANE + D].set(cb_ln @ p["dec_wv"])

    # fused patch embed; enc/dec halves on 128-lane boundaries.
    wpatch = jnp.zeros((PATCH_DIM, 2 * LANE), jnp.float32)
    wpatch = wpatch.at[:, :D].set(p["enc_patch_w"])
    wpatch = wpatch.at[:, LANE:LANE + D].set(p["dec_patch_w"])

    # fused enc-K | enc-V | dec-Q (attention scale folded into dec-Q).
    wkvq = jnp.zeros((D, 3 * LANE), jnp.float32)
    wkvq = wkvq.at[:, :D].set(p["enc_wk"])
    wkvq = wkvq.at[:, LANE:LANE + D].set(p["enc_wv"])
    wkvq = wkvq.at[:, 2 * LANE:2 * LANE + D].set(p["dec_wq"] * SCALE)

    # single consolidated table of small f32 vectors / LN params / masks.
    vecs = jnp.zeros((NUM_VEC_ROWS, 128), jnp.float32)

    def put(v, row, val):
        val = jnp.asarray(val, jnp.float32)
        return v.at[row, :val.shape[-1]].set(val)

    vecs = put(vecs, R_B_PATCH_ENC, p["enc_patch_b"] + t_final)
    vecs = put(vecs, R_B_PATCH_DEC, p["dec_patch_b"])
    vecs = put(vecs, R_LN_ENC_KV, p["enc_lnkv_g"])
    vecs = put(vecs, R_LN_ENC_KV + 1, p["enc_lnkv_b"])
    vecs = put(vecs, R_LN_ENC_H, p["enc_lnm_g"])
    vecs = put(vecs, R_LN_ENC_H + 1, p["enc_lnm_b"])
    vecs = put(vecs, R_LN_DEC_X, p["dec_ln1_g"])
    vecs = put(vecs, R_LN_DEC_X + 1, p["dec_ln1_b"])
    vecs = put(vecs, R_LN_DEC_H, p["dec_ln2_g"])
    vecs = put(vecs, R_LN_DEC_H + 1, p["dec_ln2_b"])
    vecs = put(vecs, R_LN_DEC_F, p["dec_lnf_g"])
    vecs = put(vecs, R_LN_DEC_F + 1, p["dec_lnf_b"])
    vecs = put(vecs, R_B_K_ENC, p["enc_bk"])
    vecs = put(vecs, R_B_V_ENC, p["enc_bv"])
    vecs = put(vecs, R_B_Q_DEC, p["dec_bq"] * SCALE)
    vecs = put(vecs, R_B_O_ENC, p["enc_bo"])
    vecs = put(vecs, R_B_UP_ENC, p["enc_m_b1"])
    vecs = put(vecs, R_B_DN_ENC, p["enc_m_b2"])
    vecs = put(vecs, R_B_K_DEC, p["dec_bk"])
    vecs = put(vecs, R_B_V_DEC, p["dec_bv"])
    vecs = put(vecs, R_B_O_DEC, p["dec_bo"])
    vecs = put(vecs, R_B_UP_DEC, p["dec_m_b1"])
    vecs = put(vecs, R_B_DN_DEC, p["dec_m_b2"])
    vecs = put(vecs, R_B_FINAL, p["dec_final_b"])
    vecs = put(vecs, R_CB_SQ, jnp.sum(p["codebook"] ** 2, axis=-1))

    # block-diagonal additive attention masks for the batch-folded row layout
    # (mask is statically all-ones in the original forward -> only batch isolation).
    mask_enc = jnp.where((jnp.arange(BK)[:, None] // K_TOKENS) ==
                         (jnp.arange(BL)[None, :] // L_IMG), 0.0, -1e9)
    mask_dec = jnp.where((jnp.arange(BL)[:, None] // L_IMG) ==
                         (jnp.arange(BK)[None, :] // K_TOKENS), 0.0, -1e9)
    vecs = vecs.at[R_MASK_ENC:R_MASK_ENC + BK, :BL].set(mask_enc)
    vecs = vecs.at[R_MASK_DEC:R_MASK_DEC + BL, :BK].set(mask_dec)

    return {
        "w_patch": wpatch.astype(bf16),
        "w_kvq": wkvq.astype(bf16),
        "w_o": jnp.stack([p["enc_wo"], p["dec_wo"]]).astype(bf16),
        "w_up": jnp.stack([p["enc_m_w1"], p["dec_m_w1"]]).astype(bf16),
        "w_dn": jnp.stack([p["enc_m_w2"], p["dec_m_w2"]]).astype(bf16),
        "cb_kv": cbkv.astype(bf16),
        "w_final": p["dec_final_w"].astype(bf16),
        "codebook": p["codebook"],          # f32 for exact quantizer distances
        "q_const": qconst,
        "vecs": vecs,
    }


def _full_spec(shaped):
    zeros = (0,) * len(shaped.shape)
    return pl.BlockSpec(shaped.shape, lambda i, _z=zeros: _z)


def image_renderer_forward(packed, x, recon=True):
    Bn, C, H, W = x.shape
    assert Bn == B
    # batch folded into the row dimension -> one grid step regardless of B
    patches = patchify(x, PATCH).reshape(Bn * L_IMG, PATCH_DIM)

    operands = [patches, packed["w_patch"], packed["w_kvq"], packed["w_o"],
                packed["w_up"], packed["w_dn"], packed["cb_kv"], packed["w_final"],
                packed["codebook"], packed["q_const"], packed["vecs"]]

    out_shapes = [jax.ShapeDtypeStruct((BK, 1), jnp.int32),
                  jax.ShapeDtypeStruct((BK, HIDDEN), jnp.float32)]
    if recon:
        out_shapes.append(jax.ShapeDtypeStruct((BL, PATCH_DIM), jnp.float32))

    # One fused step: the whole serial matmul chain runs once on a single TensorCore.
    # Footprint << 0.5 MiB, so no VMEM tuning / extra pipelining is warranted.
    # TODO(synk): on v7x, a batch-grid with pltpu.CORE_PARALLEL would put one batch
    # element on each of the two TensorCores instead of folding it into M.
    outs = pl.pallas_call(
        functools.partial(_fused_forward_kernel, recon=recon),
        grid=(1,),
        in_specs=[_full_spec(a) for a in operands],
        out_specs=tuple(_full_spec(s) for s in out_shapes),
        out_shape=tuple(out_shapes),
        compiler_params=pltpu.CompilerParams(dimension_semantics=("arbitrary",)),
    )(*operands)

    if recon:
        ids2, ori, pred = outs
        pred_x0 = unpatchify(pred.reshape(Bn, L_IMG, PATCH_DIM), C, H, W, PATCH)
    else:
        ids2, ori = outs
        pred_x0 = None
    ids = ids2.reshape(Bn, K_TOKENS)
    ori_hidden_states = ori.reshape(Bn, K_TOKENS, HIDDEN)

    # TODO(synk): RectifiedFlow / DiTi schedules from __init__ are unused in this
    # forward path; pretrained Selftok encoder / frozen-DiT internals are surrogates.
    return ids, ori_hidden_states, pred_x0


if __name__ == "__main__":
    key = jax.random.PRNGKey(0)
    pkey, xkey = jax.random.split(key)
    params = init_params(pkey)
    packed = pack_params(params)
    x = jax.random.normal(xkey, (B, IN_CHANNELS, LATENT, LATENT), dtype=jnp.float32)

    fwd = jax.jit(image_renderer_forward, static_argnames=("recon",))
    ids, ori_hidden_states, pred_x0 = fwd(packed, x, recon=True)
    jax.block_until_ready((ids, ori_hidden_states, pred_x0))

    assert ids.shape == (B, K_TOKENS) and ids.dtype == jnp.int32
    assert ori_hidden_states.shape == (B, K_TOKENS, HIDDEN)
    assert pred_x0.shape == x.shape
    print("KERNEL_OK")
</pallas_src>

<mosaic_0001>
module attributes {stable_mosaic.version = 11 : i64} {
  func.func @_fused_forward_kernel(%arg0: i32, %arg1: memref<32x64xf32, #tpu.memory_space<vmem>>, %arg2: memref<64x256xbf16, #tpu.memory_space<vmem>>, %arg3: memref<32x384xbf16, #tpu.memory_space<vmem>>, %arg4: memref<2x32x32xbf16, #tpu.memory_space<vmem>>, %arg5: memref<2x32x128xbf16, #tpu.memory_space<vmem>>, %arg6: memref<2x128x32xbf16, #tpu.memory_space<vmem>>, %arg7: memref<64x256xbf16, #tpu.memory_space<vmem>>, %arg8: memref<32x64xbf16, #tpu.memory_space<vmem>>, %arg9: memref<64x32xf32, #tpu.memory_space<vmem>>, %arg10: memref<2x16x32xf32, #tpu.memory_space<vmem>>, %arg11: memref<80x128xf32, #tpu.memory_space<vmem>>, %arg12: memref<16x1xi32, #tpu.memory_space<vmem>>, %arg13: memref<16x32xf32, #tpu.memory_space<vmem>>, %arg14: memref<32x64xf32, #tpu.memory_space<vmem>>) attributes {dimension_semantics = [#tpu.dimension_semantics<arbitrary>], iteration_bounds = array<i64: 1>, scalar_prefetch = 0 : i64, scratch_operands = 0 : i64, tpu.core_type = #tpu.core_type<tc>, window_params = [{pipeline_mode = #tpu.pipeline_mode<synchronous>, transform_indices = @transform_0, window_bounds = array<i64: 32, 64>}, {pipeline_mode = #tpu.pipeline_mode<synchronous>, transform_indices = @transform_1, window_bounds = array<i64: 64, 256>}, {pipeline_mode = #tpu.pipeline_mode<synchronous>, transform_indices = @transform_2, window_bounds = array<i64: 32, 384>}, {pipeline_mode = #tpu.pipeline_mode<synchronous>, transform_indices = @transform_3, window_bounds = array<i64: 2, 32, 32>}, {pipeline_mode = #tpu.pipeline_mode<synchronous>, transform_indices = @transform_4, window_bounds = array<i64: 2, 32, 128>}, {pipeline_mode = #tpu.pipeline_mode<synchronous>, transform_indices = @transform_5, window_bounds = array<i64: 2, 128, 32>}, {pipeline_mode = #tpu.pipeline_mode<synchronous>, transform_indices = @transform_6, window_bounds = array<i64: 64, 256>}, {pipeline_mode = #tpu.pipeline_mode<synchronous>, transform_indices = @transform_7, window_bounds = array<i64: 32, 64>}, {pipeline_mode = #tpu.pipeline_mode<synchronous>, transform_indices = @transform_8, window_bounds = array<i64: 64, 32>}, {pipeline_mode = #tpu.pipeline_mode<synchronous>, transform_indices = @transform_9, window_bounds = array<i64: 2, 16, 32>}, {pipeline_mode = #tpu.pipeline_mode<synchronous>, transform_indices = @transform_10, window_bounds = array<i64: 80, 128>}, {pipeline_mode = #tpu.pipeline_mode<synchronous>, transform_indices = @transform_11, window_bounds = array<i64: 16, 1>}, {pipeline_mode = #tpu.pipeline_mode<synchronous>, transform_indices = @transform_12, window_bounds = array<i64: 16, 32>}, {pipeline_mode = #tpu.pipeline_mode<synchronous>, transform_indices = @transform_13, window_bounds = array<i64: 32, 64>}]} {
    %c0 = arith.constant 0 : index
    %c0_0 = arith.constant 0 : index
    %0 = vector.load %arg1[%c0, %c0_0] : memref<32x64xf32, #tpu.memory_space<vmem>>, vector<32x64xf32>
    %c0_1 = arith.constant 0 : index
    %c0_2 = arith.constant 0 : index
    %1 = vector.load %arg2[%c0_1, %c0_2] : memref<64x256xbf16, #tpu.memory_space<vmem>>, vector<64x256xbf16>
    %2 = arith.truncf %0 : vector<32x64xf32> to vector<32x64xbf16>
    %cst = arith.constant dense<0.000000e+00> : vector<32x256xf32>
    %3 = tpu.matmul %2, %1, %cst {dimension_numbers = #tpu.dot_dimension_numbers<[1], [0], [0], [1], [0, 0, 1, 1], [], []>} : vector<32x64xbf16>, vector<64x256xbf16>, vector<32x256xf32> -> vector<32x256xf32>
    %4 = vector.extract_strided_slice %3 {offsets = [0, 0], sizes = [32, 32], strides = [1, 1]} : vector<32x256xf32> to vector<32x32xf32>
    %c0_3 = arith.constant 0 : index
    %c0_4 = arith.constant 0 : index
    %5 = vector.load %arg11[%c0_3, %c0_4] : memref<80x128xf32, #tpu.memory_space<vmem>>, vector<1x32xf32>
    %6 = vector.broadcast %5 : vector<1x32xf32> to vector<32x32xf32>
    %7 = arith.addf %4, %6 : vector<32x32xf32>
    %8 = vector.extract_strided_slice %3 {offsets = [0, 128], sizes = [32, 32], strides = [1, 1]} : vector<32x256xf32> to vector<32x32xf32>
    %c1 = arith.constant 1 : index
    %c0_5 = arith.constant 0 : index
    %9 = vector.load %arg11[%c1, %c0_5] : memref<80x128xf32, #tpu.memory_space<vmem>>, vector<1x32xf32>
    %10 = vector.broadcast %9 : vector<1x32xf32> to vector<32x32xf32>
    %11 = arith.addf %8, %10 : vector<32x32xf32>
    %cst_6 = arith.constant dense<0.000000e+00> : vector<32xf32>
    %12 = vector.multi_reduction <add>, %7, %cst_6 [1] : vector<32x32xf32> to vector<32xf32>
    %13 = vector.shape_cast %12 : vector<32xf32> to vector<32x1xf32>
    %cst_7 = arith.constant 3.200000e+01 : f32
    %14 = vector.broadcast %cst_7 : f32 to vector<32x1xf32>
    %15 = arith.divf %13, %14 : vector<32x1xf32>
    %16 = vector.broadcast %15 : vector<32x1xf32> to vector<32x32xf32>
    %17 = arith.subf %7, %16 : vector<32x32xf32>
    %18 = arith.mulf %17, %17 : vector<32x32xf32>
    %cst_8 = arith.constant dense<0.000000e+00> : vector<32xf32>
    %19 = vector.multi_reduction <add>, %18, %cst_8 [1] : vector<32x32xf32> to vector<32xf32>
    %20 = vector.shape_cast %19 : vector<32xf32> to vector<32x1xf32>
    %cst_9 = arith.constant 3.200000e+01 : f32
    %21 = vector.broadcast %cst_9 : f32 to vector<32x1xf32>
    %22 = arith.divf %20, %21 : vector<32x1xf32>
    %23 = vector.broadcast %15 : vector<32x1xf32> to vector<32x32xf32>
    %24 = arith.subf %7, %23 : vector<32x32xf32>
    %cst_10 = arith.constant 9.99999974E-6 : f32
    %25 = vector.broadcast %cst_10 : f32 to vector<32x1xf32>
    %26 = arith.addf %22, %25 : vector<32x1xf32>
    %27 = math.rsqrt %26 : vector<32x1xf32>
    %28 = vector.broadcast %27 : vector<32x1xf32> to vector<32x32xf32>
    %29 = arith.mulf %24, %28 : vector<32x32xf32>
    %c2 = arith.constant 2 : index
    %c0_11 = arith.constant 0 : index
    %30 = vector.load %arg11[%c2, %c0_11] : memref<80x128xf32, #tpu.memory_space<vmem>>, vector<1x32xf32>
    %31 = vector.broadcast %30 : vector<1x32xf32> to vector<32x32xf32>
    %32 = arith.mulf %29, %31 : vector<32x32xf32>
    %c3 = arith.constant 3 : index
    %c0_12 = arith.constant 0 : index
    %33 = vector.load %arg11[%c3, %c0_12] : memref<80x128xf32, #tpu.memory_space<vmem>>, vector<1x32xf32>
    %34 = vector.broadcast %33 : vector<1x32xf32> to vector<32x32xf32>
    %35 = arith.addf %32, %34 : vector<32x32xf32>
    %cst_13 = arith.constant dense<0.000000e+00> : vector<32xf32>
    %36 = vector.multi_reduction <add>, %11, %cst_13 [1] : vector<32x32xf32> to vector<32xf32>
    %37 = vector.shape_cast %36 : vector<32xf32> to vector<32x1xf32>
    %cst_14 = arith.constant 3.200000e+01 : f32
    %38 = vector.broadcast %cst_14 : f32 to vector<32x1xf32>
    %39 = arith.divf %37, %38 : vector<32x1xf32>
    %40 = vector.broadcast %39 : vector<32x1xf32> to vector<32x32xf32>
    %41 = arith.subf %11, %40 : vector<32x32xf32>
    %42 = arith.mulf %41, %41 : vector<32x32xf32>
    %cst_15 = arith.constant dense<0.000000e+00> : vector<32xf32>
    %43 = vector.multi_reduction <add>, %42, %cst_15 [1] : vector<32x32xf32> to vector<32xf32>
    %44 = vector.shape_cast %43 : vector<32xf32> to vector<32x1xf32>
    %cst_16 = arith.constant 3.200000e+01 : f32
    %45 = vector.broadcast %cst_16 : f32 to vector<32x1xf32>
    %46 = arith.divf %44, %45 : vector<32x1xf32>
    %47 = vector.broadcast %39 : vector<32x1xf32> to vector<32x32xf32>
    %48 = arith.subf %11, %47 : vector<32x32xf32>
    %cst_17 = arith.constant 9.99999974E-6 : f32
    %49 = vector.broadcast %cst_17 : f32 to vector<32x1xf32>
    %50 = arith.addf %46, %49 : vector<32x1xf32>
    %51 = math.rsqrt %50 : vector<32x1xf32>
    %52 = vector.broadcast %51 : vector<32x1xf32> to vector<32x32xf32>
    %53 = arith.mulf %48, %52 : vector<32x32xf32>
    %c6 = arith.constant 6 : index
    %c0_18 = arith.constant 0 : index
    %54 = vector.load %arg11[%c6, %c0_18] : memref<80x128xf32, #tpu.memory_space<vmem>>, vector<1x32xf32>
    %55 = vector.broadcast %54 : vector<1x32xf32> to vector<32x32xf32>
    %56 = arith.mulf %53, %55 : vector<32x32xf32>
    %c7 = arith.constant 7 : index
    %c0_19 = arith.constant 0 : index
    %57 = vector.load %arg11[%c7, %c0_19] : memref<80x128xf32, #tpu.memory_space<vmem>>, vector<1x32xf32>
    %58 = vector.broadcast %57 : vector<1x32xf32> to vector<32x32xf32>
    %59 = arith.addf %56, %58 : vector<32x32xf32>
    %60 = tpu.concatenate %35, %59 in 0 : vector<32x32xf32>, vector<32x32xf32> -> vector<64x32xf32>
    %c0_20 = arith.constant 0 : index
    %c0_21 = arith.constant 0 : index
    %61 = vector.load %arg3[%c0_20, %c0_21] : memref<32x384xbf16, #tpu.memory_space<vmem>>, vector<32x384xbf16>
    %62 = arith.truncf %60 : vector<64x32xf32> to vector<64x32xbf16>
    %cst_22 = arith.constant dense<0.000000e+00> : vector<64x384xf32>
    %63 = tpu.matmul %62, %61, %cst_22 {dimension_numbers = #tpu.dot_dimension_numbers<[1], [0], [0], [1], [0, 0, 1, 1], [], []>} : vector<64x32xbf16>, vector<32x384xbf16>, vector<64x384xf32> -> vector<64x384xf32>
    %64 = vector.extract_strided_slice %63 {offsets = [0, 0], sizes = [32, 32], strides = [1, 1]} : vector<64x384xf32> to vector<32x32xf32>
    %c12 = arith.constant 12 : index
    %c0_23 = arith.constant 0 : index
    %65 = vector.load %arg11[%c12, %c0_23] : memref<80x128xf32, #tpu.memory_space<vmem>>, vector<1x32xf32>
    %66 = vector.broadcast %65 : vector<1x32xf32> to vector<32x32xf32>
    %67 = arith.addf %64, %66 : vector<32x32xf32>
    %68 = vector.extract_strided_slice %63 {offsets = [0, 128], sizes = [32, 32], strides = [1, 1]} : vector<64x384xf32> to vector<32x32xf32>
    %c13 = arith.constant 13 : index
    %c0_24 = arith.constant 0 : index
    %69 = vector.load %arg11[%c13, %c0_24] : memref<80x128xf32, #tpu.memory_space<vmem>>, vector<1x32xf32>
    %70 = vector.broadcast %69 : vector<1x32xf32> to vector<32x32xf32>
    %71 = arith.addf %68, %70 : vector<32x32xf32>
    %72 = vector.extract_strided_slice %63 {offsets = [32, 256], sizes = [32, 32], strides = [1, 1]} : vector<64x384xf32> to vector<32x32xf32>
    %c14 = arith.constant 14 : index
    %c0_25 = arith.constant 0 : index
    %73 = vector.load %arg11[%c14, %c0_25] : memref<80x128xf32, #tpu.memory_space<vmem>>, vector<1x32xf32>
    %74 = vector.broadcast %73 : vector<1x32xf32> to vector<32x32xf32>
    %75 = arith.addf %72, %74 : vector<32x32xf32>
    %c0_26 = arith.constant 0 : index
    %c0_27 = arith.constant 0 : index
    %c0_28 = arith.constant 0 : index
    %76 = vector.load %arg10[%c0_26, %c0_27, %c0_28] : memref<2x16x32xf32, #tpu.memory_space<vmem>>, vector<1x16x32xf32>
    %77 = vector.shape_cast %76 : vector<1x16x32xf32> to vector<16x32xf32>
    %c1_29 = arith.constant 1 : index
    %c0_30 = arith.constant 0 : index
    %c0_31 = arith.constant 0 : index
    %78 = vector.load %arg10[%c1_29, %c0_30, %c0_31] : memref<2x16x32xf32, #tpu.memory_space<vmem>>, vector<1x16x32xf32>
    %79 = vector.shape_cast %78 : vector<1x16x32xf32> to vector<16x32xf32>
    %80 = arith.truncf %79 : vector<16x32xf32> to vector<16x32xbf16>
    %81 = arith.truncf %67 : vector<32x32xf32> to vector<32x32xbf16>
    %cst_32 = arith.constant dense<0.000000e+00> : vector<16x32xf32>
    %82 = tpu.matmul %80, %81, %cst_32 {dimension_numbers = #tpu.dot_dimension_numbers<[1], [1], [0], [0], [0, 0, 1, 0], [], []>} : vector<16x32xbf16>, vector<32x32xbf16>, vector<16x32xf32> -> vector<16x32xf32>
    %c32 = arith.constant 32 : index
    %c0_33 = arith.constant 0 : index
    %83 = vector.load %arg11[%c32, %c0_33] : memref<80x128xf32, #tpu.memory_space<vmem>>, vector<16x32xf32>
    %84 = arith.addf %82, %83 : vector<16x32xf32>
    %cst_34 = arith.constant dense<0xFF800000> : vector<16xf32>
    %85 = vector.multi_reduction <maximumf>, %84, %cst_34 [1] : vector<16x32xf32> to vector<16xf32>
    %86 = vector.shape_cast %85 : vector<16xf32> to vector<16x1xf32>
    %87 = vector.broadcast %86 : vector<16x1xf32> to vector<16x32xf32>
    %88 = arith.subf %84, %87 : vector<16x32xf32>
    %89 = math.exp %88 : vector<16x32xf32>
    %cst_35 = arith.constant dense<0.000000e+00> : vector<16xf32>
    %90 = vector.multi_reduction <add>, %89, %cst_35 [1] : vector<16x32xf32> to vector<16xf32>
    %91 = vector.shape_cast %90 : vector<16xf32> to vector<16x1xf32>
    %92 = tpu.reciprocal %91 {approx = true} : vector<16x1xf32> -> vector<16x1xf32>
    %93 = vector.broadcast %92 : vector<16x1xf32> to vector<16x32xf32>
    %94 = arith.mulf %89, %93 : vector<16x32xf32>
    %95 = arith.truncf %94 : vector<16x32xf32> to vector<16x32xbf16>
    %96 = arith.truncf %71 : vector<32x32xf32> to vector<32x32xbf16>
    %cst_36 = arith.constant dense<0.000000e+00> : vector<16x32xf32>
    %97 = tpu.matmul %95, %96, %cst_36 {dimension_numbers = #tpu.dot_dimension_numbers<[1], [0], [0], [1], [0, 0, 1, 1], [], []>} : vector<16x32xbf16>, vector<32x32xbf16>, vector<16x32xf32> -> vector<16x32xf32>
    %c0_37 = arith.constant 0 : index
    %c0_38 = arith.constant 0 : index
    %c0_39 = arith.constant 0 : index
    %98 = vector.load %arg4[%c0_37, %c0_38, %c0_39] : memref<2x32x32xbf16, #tpu.memory_space<vmem>>, vector<1x32x32xbf16>
    %99 = vector.shape_cast %98 : vector<1x32x32xbf16> to vector<32x32xbf16>
    %100 = arith.truncf %97 : vector<16x32xf32> to vector<16x32xbf16>
    %cst_40 = arith.constant dense<0.000000e+00> : vector<16x32xf32>
    %101 = tpu.matmul %100, %99, %cst_40 {dimension_numbers = #tpu.dot_dimension_numbers<[1], [0], [0], [1], [0, 0, 1, 1], [], []>} : vector<16x32xbf16>, vector<32x32xbf16>, vector<16x32xf32> -> vector<16x32xf32>
    %102 = arith.addf %77, %101 : vector<16x32xf32>
    %c15 = arith.constant 15 : index
    %c0_41 = arith.constant 0 : index
    %103 = vector.load %arg11[%c15, %c0_41] : memref<80x128xf32, #tpu.memory_space<vmem>>, vector<1x32xf32>
    %104 = vector.broadcast %103 : vector<1x32xf32> to vector<16x32xf32>
    %105 = arith.addf %102, %104 : vector<16x32xf32>
    %cst_42 = arith.constant dense<0.000000e+00> : vector<16xf32>
    %106 = vector.multi_reduction <add>, %105, %cst_42 [1] : vector<16x32xf32> to vector<16xf32>
    %107 = vector.shape_cast %106 : vector<16xf32> to vector<16x1xf32>
    %cst_43 = arith.constant 3.200000e+01 : f32
    %108 = vector.broadcast %cst_43 : f32 to vector<16x1xf32>
    %109 = arith.divf %107, %108 : vector<16x1xf32>
    %110 = vector.broadcast %109 : vector<16x1xf32> to vector<16x32xf32>
    %111 = arith.subf %105, %110 : vector<16x32xf32>
    %112 = arith.mulf %111, %111 : vector<16x32xf32>
    %cst_44 = arith.constant dense<0.000000e+00> : vector<16xf32>
    %113 = vector.multi_reduction <add>, %112, %cst_44 [1] : vector<16x32xf32> to vector<16xf32>
    %114 = vector.shape_cast %113 : vector<16xf32> to vector<16x1xf32>
    %cst_45 = arith.constant 3.200000e+01 : f32
    %115 = vector.broadcast %cst_45 : f32 to vector<16x1xf32>
    %116 = arith.divf %114, %115 : vector<16x1xf32>
    %117 = vector.broadcast %109 : vector<16x1xf32> to vector<16x32xf32>
    %118 = arith.subf %105, %117 : vector<16x32xf32>
    %cst_46 = arith.constant 9.99999974E-6 : f32
    %119 = vector.broadcast %cst_46 : f32 to vector<16x1xf32>
    %120 = arith.addf %116, %119 : vector<16x1xf32>
    %121 = math.rsqrt %120 : vector<16x1xf32>
    %122 = vector.broadcast %121 : vector<16x1xf32> to vector<16x32xf32>
    %123 = arith.mulf %118, %122 : vector<16x32xf32>
    %c4 = arith.constant 4 : index
    %c0_47 = arith.constant 0 : index
    %124 = vector.load %arg11[%c4, %c0_47] : memref<80x128xf32, #tpu.memory_space<vmem>>, vector<1x32xf32>
    %125 = vector.broadcast %124 : vector<1x32xf32> to vector<16x32xf32>
    %126 = arith.mulf %123, %125 : vector<16x32xf32>
    %c5 = arith.constant 5 : index
    %c0_48 = arith.constant 0 : index
    %127 = vector.load %arg11[%c5, %c0_48] : memref<80x128xf32, #tpu.memory_space<vmem>>, vector<1x32xf32>
    %128 = vector.broadcast %127 : vector<1x32xf32> to vector<16x32xf32>
    %129 = arith.addf %126, %128 : vector<16x32xf32>
    %c0_49 = arith.constant 0 : index
    %c0_50 = arith.constant 0 : index
    %c0_51 = arith.constant 0 : index
    %130 = vector.load %arg5[%c0_49, %c0_50, %c0_51] : memref<2x32x128xbf16, #tpu.memory_space<vmem>>, vector<1x32x128xbf16>
    %131 = vector.shape_cast %130 : vector<1x32x128xbf16> to vector<32x128xbf16>
    %132 = arith.truncf %129 : vector<16x32xf32> to vector<16x32xbf16>
    %cst_52 = arith.constant dense<0.000000e+00> : vector<16x128xf32>
    %133 = tpu.matmul %132, %131, %cst_52 {dimension_numbers = #tpu.dot_dimension_numbers<[1], [0], [0], [1], [0, 0, 1, 1], [], []>} : vector<16x32xbf16>, vector<32x128xbf16>, vector<16x128xf32> -> vector<16x128xf32>
    %c16 = arith.constant 16 : index
    %c0_53 = arith.constant 0 : index
    %134 = vector.load %arg11[%c16, %c0_53] : memref<80x128xf32, #tpu.memory_space<vmem>>, vector<1x128xf32>
    %135 = vector.broadcast %134 : vector<1x128xf32> to vector<16x128xf32>
    %136 = arith.addf %133, %135 : vector<16x128xf32>
    %137 = arith.mulf %136, %136 : vector<16x128xf32>
    %138 = arith.mulf %136, %137 : vector<16x128xf32>
    %cst_54 = arith.constant 4.471500e-02 : f32
    %139 = vector.broadcast %cst_54 : f32 to vector<16x128xf32>
    %140 = arith.mulf %139, %138 : vector<16x128xf32>
    %141 = arith.addf %136, %140 : vector<16x128xf32>
    %cst_55 = arith.constant 0.797884583 : f32
    %142 = vector.broadcast %cst_55 : f32 to vector<16x128xf32>
    %143 = arith.mulf %142, %141 : vector<16x128xf32>
    %144 = math.tanh %143 : vector<16x128xf32>
    %cst_56 = arith.constant 1.000000e+00 : f32
    %145 = vector.broadcast %cst_56 : f32 to vector<16x128xf32>
    %146 = arith.addf %145, %144 : vector<16x128xf32>
    %cst_57 = arith.constant 5.000000e-01 : f32
    %147 = vector.broadcast %cst_57 : f32 to vector<16x128xf32>
    %148 = arith.mulf %147, %146 : vector<16x128xf32>
    %149 = arith.mulf %136, %148 : vector<16x128xf32>
    %c0_58 = arith.constant 0 : index
    %c0_59 = arith.constant 0 : index
    %c0_60 = arith.constant 0 : index
    %150 = vector.load %arg6[%c0_58, %c0_59, %c0_60] : memref<2x128x32xbf16, #tpu.memory_space<vmem>>, vector<1x128x32xbf16>
    %151 = vector.shape_cast %150 : vector<1x128x32xbf16> to vector<128x32xbf16>
    %152 = arith.truncf %149 : vector<16x128xf32> to vector<16x128xbf16>
    %cst_61 = arith.constant dense<0.000000e+00> : vector<16x32xf32>
    %153 = tpu.matmul %152, %151, %cst_61 {dimension_numbers = #tpu.dot_dimension_numbers<[1], [0], [0], [1], [0, 0, 1, 1], [], []>} : vector<16x128xbf16>, vector<128x32xbf16>, vector<16x32xf32> -> vector<16x32xf32>
    %154 = arith.addf %105, %153 : vector<16x32xf32>
    %c17 = arith.constant 17 : index
    %c0_62 = arith.constant 0 : index
    %155 = vector.load %arg11[%c17, %c0_62] : memref<80x128xf32, #tpu.memory_space<vmem>>, vector<1x32xf32>
    %156 = vector.broadcast %155 : vector<1x32xf32> to vector<16x32xf32>
    %157 = arith.addf %154, %156 : vector<16x32xf32>
    %c0_63 = arith.constant 0 : index
    %c0_64 = arith.constant 0 : index
    %158 = vector.load %arg13[%c0_63, %c0_64] : memref<16x32xf32, #tpu.memory_space<vmem>>, vector<16x32xf32>
    tpu.vector_store %arg13[%c0_63, %c0_64], %157 {strides = array<i32>} : memref<16x32xf32, #tpu.memory_space<vmem>>, vector<16x32xf32>,
    %c0_65 = arith.constant 0 : index
    %c0_66 = arith.constant 0 : index
    %159 = vector.load %arg9[%c0_65, %c0_66] : memref<64x32xf32, #tpu.memory_space<vmem>>, vector<64x32xf32>
    %cst_67 = arith.constant dense<0.000000e+00> : vector<16x64xf32>
    %160 = tpu.matmul %157, %159, %cst_67 {dimension_numbers = #tpu.dot_dimension_numbers<[1], [1], [0], [0], [0, 0, 1, 0], [], []>} : vector<16x32xf32>, vector<64x32xf32>, vector<16x64xf32> -> vector<16x64xf32>
    %c24 = arith.constant 24 : index
    %c0_68 = arith.constant 0 : index
    %161 = vector.load %arg11[%c24, %c0_68] : memref<80x128xf32, #tpu.memory_space<vmem>>, vector<1x64xf32>
    %cst_69 = arith.constant 2.000000e+00 : f32
    %162 = vector.broadcast %cst_69 : f32 to vector<16x64xf32>
    %163 = arith.mulf %162, %160 : vector<16x64xf32>
    %164 = vector.broadcast %161 : vector<1x64xf32> to vector<16x64xf32>
    %165 = arith.subf %164, %163 : vector<16x64xf32>
    %cst_70 = arith.constant dense<0x7F800000> : vector<16xf32>
    %166 = vector.multi_reduction <minimumf>, %165, %cst_70 [1] : vector<16x64xf32> to vector<16xf32>
    %167 = vector.shape_cast %166 : vector<16xf32> to vector<16x1xf32>
    %168 = tpu.iota {dimensions = array<i32: 1>} : vector<16x64xi32>
    %169 = vector.broadcast %167 : vector<16x1xf32> to vector<16x64xf32>
    %170 = arith.cmpf ole, %165, %169 : vector<16x64xf32>
    %c64_i32 = arith.constant 64 : i32
    %171 = vector.broadcast %c64_i32 : i32 to vector<16x64xi32>
    %172 = arith.select %170, %168, %171 : vector<16x64xi1>, vector<16x64xi32>
    %cst_71 = arith.constant dense<2147483647> : vector<16xi32>
    %173 = vector.multi_reduction <minsi>, %172, %cst_71 [1] : vector<16x64xi32> to vector<16xi32>
    %174 = vector.shape_cast %173 : vector<16xi32> to vector<16x1xi32>
    %c0_72 = arith.constant 0 : index
    %c0_73 = arith.constant 0 : index
    %175 = vector.load %arg12[%c0_72, %c0_73] : memref<16x1xi32, #tpu.memory_space<vmem>>, vector<16x1xi32>
    tpu.vector_store %arg12[%c0_72, %c0_73], %174 {strides = array<i32>} : memref<16x1xi32, #tpu.memory_space<vmem>>, vector<16x1xi32>,
    %176 = vector.broadcast %174 : vector<16x1xi32> to vector<16x64xi32>
    %177 = arith.cmpi eq, %168, %176 : vector<16x64xi32>
    %178 = arith.extui %177 : vector<16x64xi1> to vector<16x64xi32>
    %179 = arith.sitofp %178 : vector<16x64xi32> to vector<16x64xf32>
    %180 = arith.truncf %179 : vector<16x64xf32> to vector<16x64xbf16>
    %c0_74 = arith.constant 0 : index
    %c0_75 = arith.constant 0 : index
    %181 = vector.load %arg7[%c0_74, %c0_75] : memref<64x256xbf16, #tpu.memory_space<vmem>>, vector<64x256xbf16>
    %cst_76 = arith.constant dense<0.000000e+00> : vector<16x256xf32>
    %182 = tpu.matmul %180, %181, %cst_76 {dimension_numbers = #tpu.dot_dimension_numbers<[1], [0], [0], [1], [0, 0, 1, 1], [], []>} : vector<16x64xbf16>, vector<64x256xbf16>, vector<16x256xf32> -> vector<16x256xf32>
    %183 = vector.extract_strided_slice %182 {offsets = [0, 0], sizes = [16, 32], strides = [1, 1]} : vector<16x256xf32> to vector<16x32xf32>
    %c18 = arith.constant 18 : index
    %c0_77 = arith.constant 0 : index
    %184 = vector.load %arg11[%c18, %c0_77] : memref<80x128xf32, #tpu.memory_space<vmem>>, vector<1x32xf32>
    %185 = vector.broadcast %184 : vector<1x32xf32> to vector<16x32xf32>
    %186 = arith.addf %183, %185 : vector<16x32xf32>
    %187 = vector.extract_strided_slice %182 {offsets = [0, 128], sizes = [16, 32], strides = [1, 1]} : vector<16x256xf32> to vector<16x32xf32>
    %c19 = arith.constant 19 : index
    %c0_78 = arith.constant 0 : index
    %188 = vector.load %arg11[%c19, %c0_78] : memref<80x128xf32, #tpu.memory_space<vmem>>, vector<1x32xf32>
    %189 = vector.broadcast %188 : vector<1x32xf32> to vector<16x32xf32>
    %190 = arith.addf %187, %189 : vector<16x32xf32>
    %191 = arith.truncf %75 : vector<32x32xf32> to vector<32x32xbf16>
    %192 = arith.truncf %186 : vector<16x32xf32> to vector<16x32xbf16>
    %cst_79 = arith.constant dense<0.000000e+00> : vector<32x16xf32>
    %193 = tpu.matmul %191, %192, %cst_79 {dimension_numbers = #tpu.dot_dimension_numbers<[1], [1], [0], [0], [0, 0, 1, 0], [], []>} : vector<32x32xbf16>, vector<16x32xbf16>, vector<32x16xf32> -> vector<32x16xf32>
    %c48 = arith.constant 48 : index
    %c0_80 = arith.constant 0 : index
    %194 = vector.load %arg11[%c48, %c0_80] : memref<80x128xf32, #tpu.memory_space<vmem>>, vector<32x16xf32>
    %195 = arith.addf %193, %194 : vector<32x16xf32>
    %cst_81 = arith.constant dense<0xFF800000> : vector<32xf32>
    %196 = vector.multi_reduction <maximumf>, %195, %cst_81 [1] : vector<32x16xf32> to vector<32xf32>
    %197 = vector.shape_cast %196 : vector<32xf32> to vector<32x1xf32>
    %198 = vector.broadcast %197 : vector<32x1xf32> to vector<32x16xf32>
    %199 = arith.subf %195, %198 : vector<32x16xf32>
    %200 = math.exp %199 : vector<32x16xf32>
    %cst_82 = arith.constant dense<0.000000e+00> : vector<32xf32>
    %201 = vector.multi_reduction <add>, %200, %cst_82 [1] : vector<32x16xf32> to vector<32xf32>
    %202 = vector.shape_cast %201 : vector<32xf32> to vector<32x1xf32>
    %203 = tpu.reciprocal %202 {approx = true} : vector<32x1xf32> -> vector<32x1xf32>
    %204 = vector.broadcast %203 : vector<32x1xf32> to vector<32x16xf32>
    %205 = arith.mulf %200, %204 : vector<32x16xf32>
    %206 = arith.truncf %205 : vector<32x16xf32> to vector<32x16xbf16>
    %207 = arith.truncf %190 : vector<16x32xf32> to vector<16x32xbf16>
    %cst_83 = arith.constant dense<0.000000e+00> : vector<32x32xf32>
    %208 = tpu.matmul %206, %207, %cst_83 {dimension_numbers = #tpu.dot_dimension_numbers<[1], [0], [0], [1], [0, 0, 1, 1], [], []>} : vector<32x16xbf16>, vector<16x32xbf16>, vector<32x32xf32> -> vector<32x32xf32>
    %c1_84 = arith.constant 1 : index
    %c0_85 = arith.constant 0 : index
    %c0_86 = arith.constant 0 : index
    %209 = vector.load %arg4[%c1_84, %c0_85, %c0_86] : memref<2x32x32xbf16, #tpu.memory_space<vmem>>, vector<1x32x32xbf16>
    %210 = vector.shape_cast %209 : vector<1x32x32xbf16> to vector<32x32xbf16>
    %211 = arith.truncf %208 : vector<32x32xf32> to vector<32x32xbf16>
    %cst_87 = arith.constant dense<0.000000e+00> : vector<32x32xf32>
    %212 = tpu.matmul %211, %210, %cst_87 {dimension_numbers = #tpu.dot_dimension_numbers<[1], [0], [0], [1], [0, 0, 1, 1], [], []>} : vector<32x32xbf16>, vector<32x32xbf16>, vector<32x32xf32> -> vector<32x32xf32>
    %213 = arith.addf %11, %212 : vector<32x32xf32>
    %c20 = arith.constant 20 : index
    %c0_88 = arith.constant 0 : index
    %214 = vector.load %arg11[%c20, %c0_88] : memref<80x128xf32, #tpu.memory_space<vmem>>, vector<1x32xf32>
    %215 = vector.broadcast %214 : vector<1x32xf32> to vector<32x32xf32>
    %216 = arith.addf %213, %215 : vector<32x32xf32>
    %cst_89 = arith.constant dense<0.000000e+00> : vector<32xf32>
    %217 = vector.multi_reduction <add>, %216, %cst_89 [1] : vector<32x32xf32> to vector<32xf32>
    %218 = vector.shape_cast %217 : vector<32xf32> to vector<32x1xf32>
    %cst_90 = arith.constant 3.200000e+01 : f32
    %219 = vector.broadcast %cst_90 : f32 to vector<32x1xf32>
    %220 = arith.divf %218, %219 : vector<32x1xf32>
    %221 = vector.broadcast %220 : vector<32x1xf32> to vector<32x32xf32>
    %222 = arith.subf %216, %221 : vector<32x32xf32>
    %223 = arith.mulf %222, %222 : vector<32x32xf32>
    %cst_91 = arith.constant dense<0.000000e+00> : vector<32xf32>
    %224 = vector.multi_reduction <add>, %223, %cst_91 [1] : vector<32x32xf32> to vector<32xf32>
    %225 = vector.shape_cast %224 : vector<32xf32> to vector<32x1xf32>
    %cst_92 = arith.constant 3.200000e+01 : f32
    %226 = vector.broadcast %cst_92 : f32 to vector<32x1xf32>
    %227 = arith.divf %225, %226 : vector<32x1xf32>
    %228 = vector.broadcast %220 : vector<32x1xf32> to vector<32x32xf32>
    %229 = arith.subf %216, %228 : vector<32x32xf32>
    %cst_93 = arith.constant 9.99999974E-6 : f32
    %230 = vector.broadcast %cst_93 : f32 to vector<32x1xf32>
    %231 = arith.addf %227, %230 : vector<32x1xf32>
    %232 = math.rsqrt %231 : vector<32x1xf32>
    %233 = vector.broadcast %232 : vector<32x1xf32> to vector<32x32xf32>
    %234 = arith.mulf %229, %233 : vector<32x32xf32>
    %c8 = arith.constant 8 : index
    %c0_94 = arith.constant 0 : index
    %235 = vector.load %arg11[%c8, %c0_94] : memref<80x128xf32, #tpu.memory_space<vmem>>, vector<1x32xf32>
    %236 = vector.broadcast %235 : vector<1x32xf32> to vector<32x32xf32>
    %237 = arith.mulf %234, %236 : vector<32x32xf32>
    %c9 = arith.constant 9 : index
    %c0_95 = arith.constant 0 : index
    %238 = vector.load %arg11[%c9, %c0_95] : memref<80x128xf32, #tpu.memory_space<vmem>>, vector<1x32xf32>
    %239 = vector.broadcast %238 : vector<1x32xf32> to vector<32x32xf32>
    %240 = arith.addf %237, %239 : vector<32x32xf32>
    %c1_96 = arith.constant 1 : index
    %c0_97 = arith.constant 0 : index
    %c0_98 = arith.constant 0 : index
    %241 = vector.load %arg5[%c1_96, %c0_97, %c0_98] : memref<2x32x128xbf16, #tpu.memory_space<vmem>>, vector<1x32x128xbf16>
    %242 = vector.shape_cast %241 : vector<1x32x128xbf16> to vector<32x128xbf16>
    %243 = arith.truncf %240 : vector<32x32xf32> to vector<32x32xbf16>
    %cst_99 = arith.constant dense<0.000000e+00> : vector<32x128xf32>
    %244 = tpu.matmul %243, %242, %cst_99 {dimension_numbers = #tpu.dot_dimension_numbers<[1], [0], [0], [1], [0, 0, 1, 1], [], []>} : vector<32x32xbf16>, vector<32x128xbf16>, vector<32x128xf32> -> vector<32x128xf32>
    %c21 = arith.constant 21 : index
    %c0_100 = arith.constant 0 : index
    %245 = vector.load %arg11[%c21, %c0_100] : memref<80x128xf32, #tpu.memory_space<vmem>>, vector<1x128xf32>
    %246 = vector.broadcast %245 : vector<1x128xf32> to vector<32x128xf32>
    %247 = arith.addf %244, %246 : vector<32x128xf32>
    %248 = arith.mulf %247, %247 : vector<32x128xf32>
    %249 = arith.mulf %247, %248 : vector<32x128xf32>
    %cst_101 = arith.constant 4.471500e-02 : f32
    %250 = vector.broadcast %cst_101 : f32 to vector<32x128xf32>
    %251 = arith.mulf %250, %249 : vector<32x128xf32>
    %252 = arith.addf %247, %251 : vector<32x128xf32>
    %cst_102 = arith.constant 0.797884583 : f32
    %253 = vector.broadcast %cst_102 : f32 to vector<32x128xf32>
    %254 = arith.mulf %253, %252 : vector<32x128xf32>
    %255 = math.tanh %254 : vector<32x128xf32>
    %cst_103 = arith.constant 1.000000e+00 : f32
    %256 = vector.broadcast %cst_103 : f32 to vector<32x128xf32>
    %257 = arith.addf %256, %255 : vector<32x128xf32>
    %cst_104 = arith.constant 5.000000e-01 : f32
    %258 = vector.broadcast %cst_104 : f32 to vector<32x128xf32>
    %259 = arith.mulf %258, %257 : vector<32x128xf32>
    %260 = arith.mulf %247, %259 : vector<32x128xf32>
    %c1_105 = arith.constant 1 : index
    %c0_106 = arith.constant 0 : index
    %c0_107 = arith.constant 0 : index
    %261 = vector.load %arg6[%c1_105, %c0_106, %c0_107] : memref<2x128x32xbf16, #tpu.memory_space<vmem>>, vector<1x128x32xbf16>
    %262 = vector.shape_cast %261 : vector<1x128x32xbf16> to vector<128x32xbf16>
    %263 = arith.truncf %260 : vector<32x128xf32> to vector<32x128xbf16>
    %cst_108 = arith.constant dense<0.000000e+00> : vector<32x32xf32>
    %264 = tpu.matmul %263, %262, %cst_108 {dimension_numbers = #tpu.dot_dimension_numbers<[1], [0], [0], [1], [0, 0, 1, 1], [], []>} : vector<32x128xbf16>, vector<128x32xbf16>, vector<32x32xf32> -> vector<32x32xf32>
    %265 = arith.addf %216, %264 : vector<32x32xf32>
    %c22 = arith.constant 22 : index
    %c0_109 = arith.constant 0 : index
    %266 = vector.load %arg11[%c22, %c0_109] : memref<80x128xf32, #tpu.memory_space<vmem>>, vector<1x32xf32>
    %267 = vector.broadcast %266 : vector<1x32xf32> to vector<32x32xf32>
    %268 = arith.addf %265, %267 : vector<32x32xf32>
    %cst_110 = arith.constant dense<0.000000e+00> : vector<32xf32>
    %269 = vector.multi_reduction <add>, %268, %cst_110 [1] : vector<32x32xf32> to vector<32xf32>
    %270 = vector.shape_cast %269 : vector<32xf32> to vector<32x1xf32>
    %cst_111 = arith.constant 3.200000e+01 : f32
    %271 = vector.broadcast %cst_111 : f32 to vector<32x1xf32>
    %272 = arith.divf %270, %271 : vector<32x1xf32>
    %273 = vector.broadcast %272 : vector<32x1xf32> to vector<32x32xf32>
    %274 = arith.subf %268, %273 : vector<32x32xf32>
    %275 = arith.mulf %274, %274 : vector<32x32xf32>
    %cst_112 = arith.constant dense<0.000000e+00> : vector<32xf32>
    %276 = vector.multi_reduction <add>, %275, %cst_112 [1] : vector<32x32xf32> to vector<32xf32>
    %277 = vector.shape_cast %276 : vector<32xf32> to vector<32x1xf32>
    %cst_113 = arith.constant 3.200000e+01 : f32
    %278 = vector.broadcast %cst_113 : f32 to vector<32x1xf32>
    %279 = arith.divf %277, %278 : vector<32x1xf32>
    %280 = vector.broadcast %272 : vector<32x1xf32> to vector<32x32xf32>
    %281 = arith.subf %268, %280 : vector<32x32xf32>
    %cst_114 = arith.constant 9.99999974E-6 : f32
    %282 = vector.broadcast %cst_114 : f32 to vector<32x1xf32>
    %283 = arith.addf %279, %282 : vector<32x1xf32>
    %284 = math.rsqrt %283 : vector<32x1xf32>
    %285 = vector.broadcast %284 : vector<32x1xf32> to vector<32x32xf32>
    %286 = arith.mulf %281, %285 : vector<32x32xf32>
    %c10 = arith.constant 10 : index
    %c0_115 = arith.constant 0 : index
    %287 = vector.load %arg11[%c10, %c0_115] : memref<80x128xf32, #tpu.memory_space<vmem>>, vector<1x32xf32>
    %288 = vector.broadcast %287 : vector<1x32xf32> to vector<32x32xf32>
    %289 = arith.mulf %286, %288 : vector<32x32xf32>
    %c11 = arith.constant 11 : index
    %c0_116 = arith.constant 0 : index
    %290 = vector.load %arg11[%c11, %c0_116] : memref<80x128xf32, #tpu.memory_space<vmem>>, vector<1x32xf32>
    %291 = vector.broadcast %290 : vector<1x32xf32> to vector<32x32xf32>
    %292 = arith.addf %289, %291 : vector<32x32xf32>
    %c0_117 = arith.constant 0 : index
    %c0_118 = arith.constant 0 : index
    %293 = vector.load %arg8[%c0_117, %c0_118] : memref<32x64xbf16, #tpu.memory_space<vmem>>, vector<32x64xbf16>
    %294 = arith.truncf %292 : vector<32x32xf32> to vector<32x32xbf16>
    %cst_119 = arith.constant dense<0.000000e+00> : vector<32x64xf32>
    %295 = tpu.matmul %294, %293, %cst_119 {dimension_numbers = #tpu.dot_dimension_numbers<[1], [0], [0], [1], [0, 0, 1, 1], [], []>} : vector<32x32xbf16>, vector<32x64xbf16>, vector<32x64xf32> -> vector<32x64xf32>
    %c23 = arith.constant 23 : index
    %c0_120 = arith.constant 0 : index
    %296 = vector.load %arg11[%c23, %c0_120] : memref<80x128xf32, #tpu.memory_space<vmem>>, vector<1x64xf32>
    %297 = vector.broadcast %296 : vector<1x64xf32> to vector<32x64xf32>
    %298 = arith.addf %295, %297 : vector<32x64xf32>
    %c0_121 = arith.constant 0 : index
    %c0_122 = arith.constant 0 : index
    %299 = vector.load %arg14[%c0_121, %c0_122] : memref<32x64xf32, #tpu.memory_space<vmem>>, vector<32x64xf32>
    tpu.vector_store %arg14[%c0_121, %c0_122], %298 {strides = array<i32>} : memref<32x64xf32, #tpu.memory_space<vmem>>, vector<32x64xf32>,
    return
  }
  func.func @transform_0(%arg0: i32) -> (i32, i32) {
    %c0_i32 = arith.constant 0 : i32
    %c0_i32_0 = arith.constant 0 : i32
    %c0_i32_1 = arith.constant 0 : i32
    return %c0_i32, %c0_i32_0 : i32, i32
  }
  func.func @transform_1(%arg0: i32) -> (i32, i32) {
    %c0_i32 = arith.constant 0 : i32
    %c0_i32_0 = arith.constant 0 : i32
    %c0_i32_1 = arith.constant 0 : i32
    return %c0_i32, %c0_i32_0 : i32, i32
  }
  func.func @transform_2(%arg0: i32) -> (i32, i32) {
    %c0_i32 = arith.constant 0 : i32
    %c0_i32_0 = arith.constant 0 : i32
    %c0_i32_1 = arith.constant 0 : i32
    return %c0_i32, %c0_i32_0 : i32, i32
  }
  func.func @transform_3(%arg0: i32) -> (i32, i32, i32) {
    %c0_i32 = arith.constant 0 : i32
    %c0_i32_0 = arith.constant 0 : i32
    %c0_i32_1 = arith.constant 0 : i32
    %c0_i32_2 = arith.constant 0 : i32
    return %c0_i32, %c0_i32_0, %c0_i32_1 : i32, i32, i32
  }
  func.func @transform_4(%arg0: i32) -> (i32, i32, i32) {
    %c0_i32 = arith.constant 0 : i32
    %c0_i32_0 = arith.constant 0 : i32
    %c0_i32_1 = arith.constant 0 : i32
    %c0_i32_2 = arith.constant 0 : i32
    return %c0_i32, %c0_i32_0, %c0_i32_1 : i32, i32, i32
  }
  func.func @transform_5(%arg0: i32) -> (i32, i32, i32) {
    %c0_i32 = arith.constant 0 : i32
    %c0_i32_0 = arith.constant 0 : i32
    %c0_i32_1 = arith.constant 0 : i32
    %c0_i32_2 = arith.constant 0 : i32
    return %c0_i32, %c0_i32_0, %c0_i32_1 : i32, i32, i32
  }
  func.func @transform_6(%arg0: i32) -> (i32, i32) {
    %c0_i32 = arith.constant 0 : i32
    %c0_i32_0 = arith.constant 0 : i32
    %c0_i32_1 = arith.constant 0 : i32
    return %c0_i32, %c0_i32_0 : i32, i32
  }
  func.func @transform_7(%arg0: i32) -> (i32, i32) {
    %c0_i32 = arith.constant 0 : i32
    %c0_i32_0 = arith.constant 0 : i32
    %c0_i32_1 = arith.constant 0 : i32
    return %c0_i32, %c0_i32_0 : i32, i32
  }
  func.func @transform_8(%arg0: i32) -> (i32, i32) {
    %c0_i32 = arith.constant 0 : i32
    %c0_i32_0 = arith.constant 0 : i32
    %c0_i32_1 = arith.constant 0 : i32
    return %c0_i32, %c0_i32_0 : i32, i32
  }
  func.func @transform_9(%arg0: i32) -> (i32, i32, i32) {
    %c0_i32 = arith.constant 0 : i32
    %c0_i32_0 = arith.constant 0 : i32
    %c0_i32_1 = arith.constant 0 : i32
    %c0_i32_2 = arith.constant 0 : i32
    return %c0_i32, %c0_i32_0, %c0_i32_1 : i32, i32, i32
  }
  func.func @transform_10(%arg0: i32) -> (i32, i32) {
    %c0_i32 = arith.constant 0 : i32
    %c0_i32_0 = arith.constant 0 : i32
    %c0_i32_1 = arith.constant 0 : i32
    return %c0_i32, %c0_i32_0 : i32, i32
  }
  func.func @transform_11(%arg0: i32) -> (i32, i32) {
    %c0_i32 = arith.constant 0 : i32
    %c0_i32_0 = arith.constant 0 : i32
    %c0_i32_1 = arith.constant 0 : i32
    return %c0_i32, %c0_i32_0 : i32, i32
  }
  func.func @transform_12(%arg0: i32) -> (i32, i32) {
    %c0_i32 = arith.constant 0 : i32
    %c0_i32_0 = arith.constant 0 : i32
    %c0_i32_1 = arith.constant 0 : i32
    return %c0_i32, %c0_i32_0 : i32, i32
  }
  func.func @transform_13(%arg0: i32) -> (i32, i32) {
    %c0_i32 = arith.constant 0 : i32
    %c0_i32_0 = arith.constant 0 : i32
    %c0_i32_1 = arith.constant 0 : i32
    return %c0_i32, %c0_i32_0 : i32, i32
  }
}

</mosaic_0001>

<llo_original>
// kernel: image_renderer_forward.1
$region0: #{image_renderer_forward.1}
  #allocation0 [shape = 'u32[]', space=smem, size = 0x4, offset = 0x4, fixed_abs, tag = 'smem constant byte address 0x4 - core index']
  #allocation1 [shape = 'u32[144,128]{1,0:T(1,128)}', space=vmem, size = 0x12000, scoped, tag = 'internal scratch']
  %s0 = inlined_call_operand.vmem [shape: f32[32,64], index: 0, kind: input, shape index: {}]
  %s1 = inlined_call_operand.vmem [shape: bf16[64,256], index: 1, kind: input, shape index: {}]
  %s2 = inlined_call_operand.vmem [shape: bf16[32,384], index: 2, kind: input, shape index: {}]
  %s3 = inlined_call_operand.vmem [shape: bf16[2,32,32], index: 3, kind: input, shape index: {}]
  %s4 = inlined_call_operand.vmem [shape: bf16[2,32,128], index: 4, kind: input, shape index: {}]
  %s5 = inlined_call_operand.vmem [shape: bf16[2,128,32], index: 5, kind: input, shape index: {}]
  %s6 = inlined_call_operand.vmem [shape: bf16[64,256], index: 6, kind: input, shape index: {}]
  %s7 = inlined_call_operand.vmem [shape: bf16[32,64], index: 7, kind: input, shape index: {}]
  %s8 = inlined_call_operand.vmem [shape: f32[64,32], index: 8, kind: input, shape index: {}]
  %s9 = inlined_call_operand.vmem [shape: f32[2,16,32], index: 9, kind: input, shape index: {}]
  %s10 = inlined_call_operand.vmem [shape: f32[80,128], index: 10, kind: input, shape index: {}]
  %s11 = inlined_call_operand.vmem [shape: s32[16,1], index: 11, kind: output, shape index: {0}]
  %s12 = inlined_call_operand.hbm [shape: f32[16,32], index: 12, kind: output, shape index: {1}]
  %s13 = inlined_call_operand.vmem [shape: f32[32,64], index: 13, kind: output, shape index: {2}]
  %14 = xla_tuple %s11, %s12, %s13
  %s15 = sld [smem:[#allocation0]]
  $region70: #{image_renderer_forward.1} parent=0
    _
  %s17 = ssub.s32 1, %s15
  %s18 = scalar_select 0, %s17, %s15
  $region1: #{image_renderer_forward.1} parent=0
    #allocation2 [shape = 'u8[8192]{0}', space=vmem, size = 0x2000, scoped, tag = 'output window, operand 1, single buffered']
    #allocation3 [shape = 's32[1]{0}', space=sflag, size = 0x4, scoped, tag = 'scoped memory for image_renderer_forward.1']
    %19 = vsyncpa [#allocation3], 0
    // Predicated region
    $region2: #{image_renderer_forward.1} parent=1 // pred_check
      _
    $region3: #{image_renderer_forward.1} parent=1 // pred_check_branch
      %21 = sbr.rel (0) target = $region5
    $region4: #{image_renderer_forward.1} parent=1 // pred_region
      _
    $region5: #{image_renderer_forward.1} parent=1 // pred_fallthru
      _
    // Predicated region
    $region6: #{image_renderer_forward.1} parent=1 // pred_check
      _
    $region7: #{image_renderer_forward.1} parent=1 // pred_check_branch
      %23 = sbr.rel (0) target = $region9
    $region8: #{image_renderer_forward.1} parent=1 // pred_region
      _
    $region9: #{image_renderer_forward.1} parent=1 // pred_fallthru
      _
    // Predicated region
    $region10: #{image_renderer_forward.1} parent=1 // pred_check
      _
    $region11: #{image_renderer_forward.1} parent=1 // pred_check_branch
      %25 = sbr.rel (0) target = $region13
    $region12: #{image_renderer_forward.1} parent=1 // pred_region
      _
    $region13: #{image_renderer_forward.1} parent=1 // pred_fallthru
      _
    // Predicated region
    $region14: #{image_renderer_forward.1} parent=1 // pred_check
      _
    $region15: #{image_renderer_forward.1} parent=1 // pred_check_branch
      %27 = sbr.rel (0) target = $region17
    $region16: #{image_renderer_forward.1} parent=1 // pred_region
      _
    $region17: #{image_renderer_forward.1} parent=1 // pred_fallthru
      _
    // Predicated region
    $region18: #{image_renderer_forward.1} parent=1 // pred_check
      _
    $region19: #{image_renderer_forward.1} parent=1 // pred_check_branch
      %29 = sbr.rel (0) target = $region21
    $region20: #{image_renderer_forward.1} parent=1 // pred_region
      _
    $region21: #{image_renderer_forward.1} parent=1 // pred_fallthru
      _
    // Predicated region
    $region22: #{image_renderer_forward.1} parent=1 // pred_check
      _
    $region23: #{image_renderer_forward.1} parent=1 // pred_check_branch
      %31 = sbr.rel (0) target = $region25
    $region24: #{image_renderer_forward.1} parent=1 // pred_region
      _
    $region25: #{image_renderer_forward.1} parent=1 // pred_fallthru
      _
    // Predicated region
    $region26: #{image_renderer_forward.1} parent=1 // pred_check
      _
    $region27: #{image_renderer_forward.1} parent=1 // pred_check_branch
      %33 = sbr.rel (0) target = $region29
    $region28: #{image_renderer_forward.1} parent=1 // pred_region
      _
    $region29: #{image_renderer_forward.1} parent=1 // pred_fallthru
      _
    // Predicated region
    $region30: #{image_renderer_forward.1} parent=1 // pred_check
      _
    $region31: #{image_renderer_forward.1} parent=1 // pred_check_branch
      %35 = sbr.rel (0) target = $region33
    $region32: #{image_renderer_forward.1} parent=1 // pred_region
      _
    $region33: #{image_renderer_forward.1} parent=1 // pred_fallthru
      _
    // Predicated region
    $region34: #{image_renderer_forward.1} parent=1 // pred_check
      _
    $region35: #{image_renderer_forward.1} parent=1 // pred_check_branch
      %37 = sbr.rel (0) target = $region37
    $region36: #{image_renderer_forward.1} parent=1 // pred_region
      _
    $region37: #{image_renderer_forward.1} parent=1 // pred_fallthru
      _
    // Predicated region
    $region38: #{image_renderer_forward.1} parent=1 // pred_check
      _
    $region39: #{image_renderer_forward.1} parent=1 // pred_check_branch
      %39 = sbr.rel (0) target = $region41
    $region40: #{image_renderer_forward.1} parent=1 // pred_region
      _
    $region41: #{image_renderer_forward.1} parent=1 // pred_fallthru
      _
    // Predicated region
    $region42: #{image_renderer_forward.1} parent=1 // pred_check
      _
    $region43: #{image_renderer_forward.1} parent=1 // pred_check_branch
      %41 = sbr.rel (0) target = $region45
    $region44: #{image_renderer_forward.1} parent=1 // pred_region
      _
    $region45: #{image_renderer_forward.1} parent=1 // pred_fallthru
      _
    %v43 = vld [vmem:[%s0] sm:$0xff]
    %v44 = vld [vmem:[%s0 + $0x8] sm:$0xff]
    %v45 = vld [vmem:[%s0 + $0x10] sm:$0xff]
    %v46 = vld [vmem:[%s0 + $0x18] sm:$0xff]
    %v47 = vld [vmem:[%s1] sm:$0xff]
    %v48 = vld [vmem:[%s1 + $0x8] sm:$0xff]
    %v49 = vld [vmem:[%s1 + $0x10] sm:$0xff]
    %v50 = vld [vmem:[%s1 + $0x18] sm:$0xff]
    %v51 = vld [vmem:[%s1 + $0x20] sm:$0xff]
    %v52 = vld [vmem:[%s1 + $0x28] sm:$0xff]
    %v53 = vld [vmem:[%s1 + $0x30] sm:$0xff]
    %v54 = vld [vmem:[%s1 + $0x38] sm:$0xff]
    %v55 = vpack.c.bf16 %v44, %v43
    %v56 = vpack.c.bf16 %v46, %v45
    %v65 = vunpack.c.l.b16 %v47
    %v66 = vunpack.c.h.b16 %v47
    %v67 = vunpack.c.l.b16 %v48
    %v68 = vunpack.c.h.b16 %v48
    %v69 = vunpack.c.l.b16 %v49
    %v70 = vunpack.c.h.b16 %v49
    %v71 = vunpack.c.l.b16 %v50
    %v72 = vunpack.c.h.b16 %v50
    %v73 = vunpack.c.l.b16 %v51
    %v74 = vunpack.c.h.b16 %v51
    %v75 = vunpack.c.l.b16 %v52
    %v76 = vunpack.c.h.b16 %v52
    %v77 = vunpack.c.l.b16 %v53
    %v78 = vunpack.c.h.b16 %v53
    %v79 = vunpack.c.l.b16 %v54
    %v80 = vunpack.c.h.b16 %v54
    %v81 = vpack.c.b16 %v67, %v65
    %v82 = vpack.c.b16 %v68, %v66
    %v83 = vpack.c.b16 %v71, %v69
    %v84 = vpack.c.b16 %v72, %v70
    %v85 = vpack.c.b16 %v75, %v73
    %v86 = vpack.c.b16 %v76, %v74
    %v87 = vpack.c.b16 %v79, %v77
    %v88 = vpack.c.b16 %v80, %v78
    %vm97 = vcmask 523264
    %v99 = vsel %vm97, %v55, 0
    %v102 = vsel %vm97, %v56, 0
    %104 = vmatprep.subr.bf16.mxu0 0
    %105 = vmatpush1.bf16.msra.mxu0 0
    %106 = vmatprep.subr.bf16.mxu0 0
    %107 = vmatpush1.bf16.msra.mxu0 0
    %108 = vmatprep.subr.bf16.mxu0 0
    %109 = vmatpush1.bf16.msra.mxu0 0
    %110 = vmatprep.subr.bf16.mxu0 0
    %111 = vmatpush1.bf16.msra.mxu0 0
    %112 = vmatprep.subr.bf16.mxu0 %v88
    %113 = vmatpush1.bf16.msra.mxu0 %v87
    %114 = vmatprep.subr.bf16.mxu0 %v86
    %115 = vmatpush1.bf16.msra.mxu0 %v85
    %116 = vmatprep.subr.bf16.mxu0 %v84
    %117 = vmatpush1.bf16.msra.mxu0 %v83
    %118 = vmatprep.subr.bf16.mxu0 %v82
    %119 = vmatpush1.bf16.msra.mxu0 %v81
    %120 = vmatprep.subr.bf16.mxu0 0
    %121 = vmatpush2.bf16.msra.mxu0 0
    %122 = vmatprep.subr.bf16.mxu0 0
    %123 = vmatpush2.bf16.msra.mxu0 0
    %124 = vmatprep.subr.bf16.mxu0 0
    %125 = vmatpush2.bf16.msra.mxu0 0
    %126 = vmatprep.subr.bf16.mxu0 0
    %127 = vmatpush2.bf16.msra.mxu0 0
    %128 = vmatprep.subr.bf16.mxu0 0
    %129 = vmatpush2.bf16.msra.mxu0 0
    %130 = vmatprep.subr.bf16.mxu0 0
    %131 = vmatpush2.bf16.msra.mxu0 0
    %132 = vmatprep.subr.bf16.mxu0 0
    %133 = vmatpush2.bf16.msra.mxu0 0
    %134 = vmatprep.subr.bf16.mxu0 0
    %135 = vmatpush2.bf16.msra.mxu0 0
    %136 = vmatprep.mubr.bf16.mxu0 0
    %137 = vmatmul.mubr.bf16.gmra.mxu0 %v99
    %v138 = vpop.f32.mrf.mxu0
    %v139 = vadd.f32 0.0, %v138
    %v140 = vpop.f32.mrf.mxu0
    %v141 = vadd.f32 0.0, %v140
    %v142 = vpop.f32.mrf.mxu0
    %v143 = vadd.f32 0.0, %v142
    %v144 = vpop.f32.mrf.mxu0
    %v145 = vadd.f32 0.0, %v144
    %146 = vmatprep.mubr.bf16.mxu0 0
    %147 = vmatmul.mubr.bf16.gmra.mxu0 %v102
    %v148 = vpop.f32.mrf.mxu0
    %v149 = vadd.f32 0.0, %v148
    %v150 = vpop.f32.mrf.mxu0
    %v151 = vadd.f32 0.0, %v150
    %v152 = vpop.f32.mrf.mxu0
    %v153 = vadd.f32 0.0, %v152
    %v154 = vpop.f32.mrf.mxu0
    %v155 = vadd.f32 0.0, %v154
    %156 = vdwg.mxu0
    %v157 = vld [vmem:[%s10] sm:$0x1]
    %v158 = vlaneseq
    %v159 = vshrl.u32 %v158, 7
    %v160 = vsub.s32 0, %v159
    %v161 = vrot.slane %v157, %v160
    %v162 = vadd.f32 %v139, %v161
    %v163 = vadd.f32 %v143, %v161
    %v164 = vadd.f32 %v149, %v161
    %v165 = vadd.f32 %v153, %v161
    %v166 = vld [vmem:[%s10 + $0x1] sm:$0x1]
    %v167 = vlaneseq
    %v168 = vshrl.u32 %v167, 7
    %v169 = vsub.s32 0, %v168
    %v170 = vrot.slane %v166, %v169
    %v171 = vadd.f32 %v141, %v170
    %v172 = vadd.f32 %v145, %v170
    %v173 = vadd.f32 %v151, %v170
    %v174 = vadd.f32 %v155, %v170
    %vm175 = vcmask 261120
    %v176 = vsel %vm175, %v162, 0.0
    %177 = vadd.xlane.f32.xlu0 %v176
    %v178 = vpop.xlane.xlu0 %177
    %v179 = vsel %vm175, %v163, 0.0
    %180 = vadd.xlane.f32.xlu0 %v179
    %v181 = vpop.xlane.xlu0 %180
    %v182 = vsel %vm175, %v164, 0.0
    %183 = vadd.xlane.f32.xlu0 %v182
    %v184 = vpop.xlane.xlu0 %183
    %v185 = vsel %vm175, %v165, 0.0
    %186 = vadd.xlane.f32.xlu0 %v185
    %v187 = vpop.xlane.xlu0 %186
    %v188 = vrcp.pop 32.0
    %v189 = vmul.f32 %v178, %v188
    %v190 = vmul.f32 %v181, %v188
    %v191 = vmul.f32 %v184, %v188
    %v192 = vmul.f32 %v187, %v188
    %v193 = vsub.f32 %v162, %v189
    %v194 = vsub.f32 %v163, %v190
    %v195 = vsub.f32 %v164, %v191
    %v196 = vsub.f32 %v165, %v192
    %v197 = vmul.f32 %v193, %v193
    %v198 = vmul.f32 %v194, %v194
    %v199 = vmul.f32 %v195, %v195
    %v200 = vmul.f32 %v196, %v196
    %v201 = vsel %vm175, %v197, 0.0
    %202 = vadd.xlane.f32.xlu0 %v201
    %v203 = vpop.xlane.xlu0 %202
    %v204 = vsel %vm175, %v198, 0.0
    %205 = vadd.xlane.f32.xlu0 %v204
    %v206 = vpop.xlane.xlu0 %205
    %v207 = vsel %vm175, %v199, 0.0
    %208 = vadd.xlane.f32.xlu0 %v207
    %v209 = vpop.xlane.xlu0 %208
    %v210 = vsel %vm175, %v200, 0.0
    %211 = vadd.xlane.f32.xlu0 %v210
    %v212 = vpop.xlane.xlu0 %211
    %v213 = vmul.f32 %v203, %v188
    %v214 = vmul.f32 %v206, %v188
    %v215 = vmul.f32 %v209, %v188
    %v216 = vmul.f32 %v212, %v188
    %v217 = vadd.f32 %v213, 1e-05
    %v218 = vadd.f32 %v214, 1e-05
    %v219 = vadd.f32 %v215, 1e-05
    %v220 = vadd.f32 %v216, 1e-05
    %v221 = vrsqrt.pop %v217
    %v222 = vrsqrt.pop %v218
    %v223 = vrsqrt.pop %v219
    %v224 = vrsqrt.pop %v220
    %v225 = vmul.f32 %v193, %v221
    %v226 = vmul.f32 %v194, %v222
    %v227 = vmul.f32 %v195, %v223
    %v228 = vmul.f32 %v196, %v224
    %v229 = vld [vmem:[%s10 + $0x2] sm:$0x1]
    %v230 = vlaneseq
    %v231 = vshrl.u32 %v230, 7
    %v232 = vsub.s32 0, %v231
    %v233 = vrot.slane %v229, %v232
    %v234 = vmul.f32 %v225, %v233
    %v235 = vmul.f32 %v226, %v233
    %v236 = vmul.f32 %v227, %v233
    %v237 = vmul.f32 %v228, %v233
    %v238 = vld [vmem:[%s10 + $0x3] sm:$0x1]
    %v239 = vlaneseq
    %v240 = vshrl.u32 %v239, 7
    %v241 = vsub.s32 0, %v240
    %v242 = vrot.slane %v238, %v241
    %v243 = vadd.f32 %v234, %v242
    %v244 = vadd.f32 %v235, %v242
    %v245 = vadd.f32 %v236, %v242
    %v246 = vadd.f32 %v237, %v242
    %v247 = vsel %vm175, %v171, 0.0
    %248 = vadd.xlane.f32.xlu0 %v247
    %v249 = vpop.xlane.xlu0 %248
    %v250 = vsel %vm175, %v172, 0.0
    %251 = vadd.xlane.f32.xlu0 %v250
    %v252 = vpop.xlane.xlu0 %251
    %v253 = vsel %vm175, %v173, 0.0
    %254 = vadd.xlane.f32.xlu0 %v253
    %v255 = vpop.xlane.xlu0 %254
    %v256 = vsel %vm175, %v174, 0.0
    %257 = vadd.xlane.f32.xlu0 %v256
    %v258 = vpop.xlane.xlu0 %257
    %v259 = vmul.f32 %v249, %v188
    %v260 = vmul.f32 %v252, %v188
    %v261 = vmul.f32 %v255, %v188
    %v262 = vmul.f32 %v258, %v188
    %v263 = vsub.f32 %v171, %v259
    %v264 = vsub.f32 %v172, %v260
    %v265 = vsub.f32 %v173, %v261
    %v266 = vsub.f32 %v174, %v262
    %v267 = vmul.f32 %v263, %v263
    %v268 = vmul.f32 %v264, %v264
    %v269 = vmul.f32 %v265, %v265
    %v270 = vmul.f32 %v266, %v266
    %v271 = vsel %vm175, %v267, 0.0
    %272 = vadd.xlane.f32.xlu0 %v271
    %v273 = vpop.xlane.xlu0 %272
    %v274 = vsel %vm175, %v268, 0.0
    %275 = vadd.xlane.f32.xlu0 %v274
    %v276 = vpop.xlane.xlu0 %275
    %v277 = vsel %vm175, %v269, 0.0
    %278 = vadd.xlane.f32.xlu0 %v277
    %v279 = vpop.xlane.xlu0 %278
    %v280 = vsel %vm175, %v270, 0.0
    %281 = vadd.xlane.f32.xlu0 %v280
    %v282 = vpop.xlane.xlu0 %281
    %v283 = vmul.f32 %v273, %v188
    %v284 = vmul.f32 %v276, %v188
    %v285 = vmul.f32 %v279, %v188
    %v286 = vmul.f32 %v282, %v188
    %v287 = vadd.f32 %v283, 1e-05
    %v288 = vadd.f32 %v284, 1e-05
    %v289 = vadd.f32 %v285, 1e-05
    %v290 = vadd.f32 %v286, 1e-05
    %v291 = vrsqrt.pop %v287
    %v292 = vrsqrt.pop %v288
    %v293 = vrsqrt.pop %v289
    %v294 = vrsqrt.pop %v290
    %v295 = vmul.f32 %v263, %v291
    %v296 = vmul.f32 %v264, %v292
    %v297 = vmul.f32 %v265, %v293
    %v298 = vmul.f32 %v266, %v294
    %v299 = vld [vmem:[%s10 + $0x6] sm:$0x1]
    %v300 = vlaneseq
    %v301 = vshrl.u32 %v300, 7
    %v302 = vsub.s32 0, %v301
    %v303 = vrot.slane %v299, %v302
    %v304 = vmul.f32 %v295, %v303
    %v305 = vmul.f32 %v296, %v303
    %v306 = vmul.f32 %v297, %v303
    %v307 = vmul.f32 %v298, %v303
    %v308 = vld [vmem:[%s10 + $0x7] sm:$0x1]
    %v309 = vlaneseq
    %v310 = vshrl.u32 %v309, 7
    %v311 = vsub.s32 0, %v310
    %v312 = vrot.slane %v308, %v311
    %v313 = vadd.f32 %v304, %v312
    %v314 = vadd.f32 %v305, %v312
    %v315 = vadd.f32 %v306, %v312
    %v316 = vadd.f32 %v307, %v312
    %v317 = vld [vmem:[%s2] sm:$0xff]
    %v318 = vld [vmem:[%s2 + $0x8] sm:$0xf]
    %v319 = vld [vmem:[%s2 + $0xc] sm:$0xff]
    %v320 = vld [vmem:[%s2 + $0x14] sm:$0xf]
    %v321 = vld [vmem:[%s2 + $0x18] sm:$0xff]
    %v322 = vld [vmem:[%s2 + $0x20] sm:$0xf]
    %v323 = vld [vmem:[%s2 + $0x24] sm:$0xff]
    %v324 = vld [vmem:[%s2 + $0x2c] sm:$0xf]
    %v325 = vpack.c.bf16 %v244, %v243
    %v326 = vpack.c.bf16 %v246, %v245
    %v327 = vpack.c.bf16 %v314, %v313
    %v328 = vpack.c.bf16 %v316, %v315
    %v337 = vunpack.c.l.b16 %v317
    %v338 = vunpack.c.h.b16 %v317
    %v339 = vunpack.c.l.b16 %v318
    %v340 = vunpack.c.l.b16 %v319
    %v341 = vunpack.c.h.b16 %v319
    %v342 = vunpack.c.l.b16 %v320
    %v343 = vunpack.c.l.b16 %v321
    %v344 = vunpack.c.h.b16 %v321
    %v345 = vunpack.c.l.b16 %v322
    %v346 = vunpack.c.l.b16 %v323
    %v347 = vunpack.c.h.b16 %v323
    %v348 = vunpack.c.l.b16 %v324
    %v349 = vpack.c.b16 %v340, %v337
    %v350 = vpack.c.b16 %v341, %v338
    %v351 = vpack.c.b16 %v342, %v339
    %v352 = vpack.c.b16 %v346, %v343
    %v353 = vpack.c.b16 %v347, %v344
    %v354 = vpack.c.b16 %v348, %v345
    %v362 = vsel %vm175, %v325, 0
    %v365 = vsel %vm175, %v326, 0
    %v368 = vsel %vm175, %v327, 0
    %v371 = vsel %vm175, %v328, 0
    %373 = vmatprep.subr.bf16.mxu0 0
    %374 = vmatpush1.bf16.msra.mxu0 0
    %375 = vmatprep.subr.bf16.mxu0 0
    %376 = vmatpush1.bf16.msra.mxu0 0
    %377 = vmatprep.subr.bf16.mxu0 0
    %378 = vmatpush1.bf16.msra.mxu0 0
    %379 = vmatprep.subr.bf16.mxu0 0
    %380 = vmatpush1.bf16.msra.mxu0 0
    %381 = vmatprep.subr.bf16.mxu0 0
    %382 = vmatpush1.bf16.msra.mxu0 0
    %383 = vmatprep.subr.bf16.mxu0 0
    %384 = vmatpush1.bf16.msra.mxu0 0
    %385 = vmatprep.subr.bf16.mxu0 %v353
    %386 = vmatpush1.bf16.msra.mxu0 %v352
    %387 = vmatprep.subr.bf16.mxu0 %v350
    %388 = vmatpush1.bf16.msra.mxu0 %v349
    %389 = vmatprep.subr.bf16.mxu0 0
    %390 = vmatpush2.bf16.msra.mxu0 0
    %391 = vmatprep.subr.bf16.mxu0 0
    %392 = vmatpush2.bf16.msra.mxu0 0
    %393 = vmatprep.subr.bf16.mxu0 0
    %394 = vmatpush2.bf16.msra.mxu0 0
    %395 = vmatprep.subr.bf16.mxu0 0
    %396 = vmatpush2.bf16.msra.mxu0 0
    %397 = vmatprep.subr.bf16.mxu0 0
    %398 = vmatpush2.bf16.msra.mxu0 0
    %399 = vmatprep.subr.bf16.mxu0 0
    %400 = vmatpush2.bf16.msra.mxu0 0
    %401 = vmatprep.subr.bf16.mxu0 0
    %402 = vmatpush2.bf16.msra.mxu0 0
    %403 = vmatprep.subr.bf16.mxu0 0
    %404 = vmatpush2.bf16.msra.mxu0 0
    %405 = vmatprep.mubr.bf16.mxu0 0
    %406 = vmatmul.mubr.bf16.gmra.mxu0 %v362
    %v407 = vpop.f32.mrf.mxu0
    %v408 = vadd.f32 0.0, %v407
    %v409 = vpop.f32.mrf.mxu0
    %v410 = vadd.f32 0.0, %v409
    %v411 = vpop.f32.mrf.mxu0
    %v412 = vadd.f32 0.0, %v411
    %v413 = vpop.f32.mrf.mxu0
    %v414 = vadd.f32 0.0, %v413
    %415 = vmatprep.mubr.bf16.mxu0 0
    %416 = vmatmul.mubr.bf16.gmra.mxu0 %v365
    %v417 = vpop.f32.mrf.mxu0
    %v418 = vadd.f32 0.0, %v417
    %v419 = vpop.f32.mrf.mxu0
    %v420 = vadd.f32 0.0, %v419
    %v421 = vpop.f32.mrf.mxu0
    %v422 = vadd.f32 0.0, %v421
    %v423 = vpop.f32.mrf.mxu0
    %v424 = vadd.f32 0.0, %v423
    %425 = vmatprep.mubr.bf16.mxu0 0
    %426 = vmatmul.mubr.bf16.gmra.mxu0 %v368
    %v427 = vpop.f32.mrf.mxu0
    %v428 = vpop.f32.mrf.mxu0
    %v429 = vpop.f32.mrf.mxu0
    %v430 = vpop.f32.mrf.mxu0
    %431 = vmatprep.mubr.bf16.mxu0 0
    %432 = vmatmul.mubr.bf16.gmra.mxu0 %v371
    %v433 = vpop.f32.mrf.mxu0
    %v434 = vpop.f32.mrf.mxu0
    %v435 = vpop.f32.mrf.mxu0
    %v436 = vpop.f32.mrf.mxu0
    %437 = vdwg.mxu0
    %438 = vmatprep.subr.bf16.mxu0 0
    %439 = vmatpush1.bf16.msra.mxu0 0
    %440 = vmatprep.subr.bf16.mxu0 0
    %441 = vmatpush1.bf16.msra.mxu0 0
    %442 = vmatprep.subr.bf16.mxu0 0
    %443 = vmatpush1.bf16.msra.mxu0 0
    %444 = vmatprep.subr.bf16.mxu0 0
    %445 = vmatpush1.bf16.msra.mxu0 0
    %446 = vmatprep.subr.bf16.mxu0 0
    %447 = vmatpush1.bf16.msra.mxu0 0
    %448 = vmatprep.subr.bf16.mxu0 0
    %449 = vmatpush1.bf16.msra.mxu0 0
    %450 = vmatprep.subr.bf16.mxu0 0
    %451 = vmatpush1.bf16.msra.mxu0 %v354
    %452 = vmatprep.subr.bf16.mxu0 0
    %453 = vmatpush1.bf16.msra.mxu0 %v351
    %454 = vmatprep.subr.bf16.mxu0 0
    %455 = vmatpush2.bf16.msra.mxu0 0
    %456 = vmatprep.subr.bf16.mxu0 0
    %457 = vmatpush2.bf16.msra.mxu0 0
    %458 = vmatprep.subr.bf16.mxu0 0
    %459 = vmatpush2.bf16.msra.mxu0 0
    %460 = vmatprep.subr.bf16.mxu0 0
    %461 = vmatpush2.bf16.msra.mxu0 0
    %462 = vmatprep.subr.bf16.mxu0 0
    %463 = vmatpush2.bf16.msra.mxu0 0
    %464 = vmatprep.subr.bf16.mxu0 0
    %465 = vmatpush2.bf16.msra.mxu0 0
    %466 = vmatprep.subr.bf16.mxu0 0
    %467 = vmatpush2.bf16.msra.mxu0 0
    %468 = vmatprep.subr.bf16.mxu0 0
    %469 = vmatpush2.bf16.msra.mxu0 0
    %470 = vmatprep.mubr.bf16.mxu0 0
    %471 = vmatmul.mubr.bf16.gmra.mxu0 %v362
    %v472 = vpop.f32.mrf.mxu0
    %v473 = vpop.f32.mrf.mxu0
    %v474 = vpop.f32.mrf.mxu0
    %v475 = vpop.f32.mrf.mxu0
    %476 = vmatprep.mubr.bf16.mxu0 0
    %477 = vmatmul.mubr.bf16.gmra.mxu0 %v365
    %v478 = vpop.f32.mrf.mxu0
    %v479 = vpop.f32.mrf.mxu0
    %v480 = vpop.f32.mrf.mxu0
    %v481 = vpop.f32.mrf.mxu0
    %482 = vmatprep.mubr.bf16.mxu0 0
    %483 = vmatmul.mubr.bf16.gmra.mxu0 %v368
    %v484 = vpop.f32.mrf.mxu0
    %v485 = vadd.f32 0.0, %v484
    %v486 = vpop.f32.mrf.mxu0
    %v487 = vpop.f32.mrf.mxu0
    %v488 = vadd.f32 0.0, %v487
    %v489 = vpop.f32.mrf.mxu0
    %490 = vmatprep.mubr.bf16.mxu0 0
    %491 = vmatmul.mubr.bf16.gmra.mxu0 %v371
    %v492 = vpop.f32.mrf.mxu0
    %v493 = vadd.f32 0.0, %v492
    %v494 = vpop.f32.mrf.mxu0
    %v495 = vpop.f32.mrf.mxu0
    %v496 = vadd.f32 0.0, %v495
    %v497 = vpop.f32.mrf.mxu0
    %498 = vdwg.mxu0
    %v499 = vld [vmem:[%s10 + $0xc] sm:$0x1]
    %v500 = vlaneseq
    %v501 = vshrl.u32 %v500, 7
    %v502 = vsub.s32 0, %v501
    %v503 = vrot.slane %v499, %v502
    %v504 = vadd.f32 %v408, %v503
    %v505 = vadd.f32 %v412, %v503
    %v506 = vadd.f32 %v418, %v503
    %v507 = vadd.f32 %v422, %v503
    %v508 = vld [vmem:[%s10 + $0xd] sm:$0x1]
    %v509 = vlaneseq
    %v510 = vshrl.u32 %v509, 7
    %v511 = vsub.s32 0, %v510
    %v512 = vrot.slane %v508, %v511
    %v513 = vadd.f32 %v410, %v512
    %v514 = vadd.f32 %v414, %v512
    %v515 = vadd.f32 %v420, %v512
    %v516 = vadd.f32 %v424, %v512
    %v517 = vld [vmem:[%s10 + $0xe] sm:$0x1]
    %v518 = vlaneseq
    %v519 = vshrl.u32 %v518, 7
    %v520 = vsub.s32 0, %v519
    %v521 = vrot.slane %v517, %v520
    %v522 = vadd.f32 %v485, %v521
    %v523 = vadd.f32 %v488, %v521
    %v524 = vadd.f32 %v493, %v521
    %v525 = vadd.f32 %v496, %v521
    %v526 = vld [vmem:[%s9] sm:$0xff]
    %v527 = vld [vmem:[%s9 + $0x8] sm:$0xff]
    %s528 = scalar_lea.vmem %s9, 16
    %v529 = vld [vmem:[%s528] sm:$0xff]
    %v530 = vld [vmem:[%s528 + $0x8] sm:$0xff]
    %v531 = vpack.c.bf16 %v530, %v529
    %v532 = vpack.c.bf16 %v505, %v504
    %v533 = vpack.c.bf16 %v507, %v506
    %v534 = vld [vmem:[%s10 + $0x20] sm:$0xff]
    %v535 = vld [vmem:[%s10 + $0x28] sm:$0xff]
    %v537 = vsel %vm175, %v531, 0
    %v540 = vsel %vm175, %v532, 0
    %v543 = vsel %vm175, %v533, 0
    %545 = vmatprep.subr.bf16.mxu0 0
    %546 = vmatpush1.bf16.xpose.msra.mxu0 0
    %547 = vmatprep.subr.bf16.mxu0 0
    %548 = vmatpush1.bf16.xpose.msra.mxu0 0
    %549 = vmatprep.subr.bf16.mxu0 0
    %550 = vmatpush1.bf16.xpose.msra.mxu0 0
    %551 = vmatprep.subr.bf16.mxu0 0
    %552 = vmatpush1.bf16.xpose.msra.mxu0 0
    %553 = vmatprep.subr.bf16.mxu0 0
    %554 = vmatpush1.bf16.xpose.msra.mxu0 0
    %555 = vmatprep.subr.bf16.mxu0 0
    %556 = vmatpush1.bf16.xpose.msra.mxu0 0
    %557 = vmatprep.subr.bf16.mxu0 0
    %558 = vmatpush1.bf16.xpose.msra.mxu0 %v543
    %559 = vmatprep.subr.bf16.mxu0 0
    %560 = vmatpush1.bf16.xpose.msra.mxu0 %v540
    %561 = vmatprep.subr.bf16.mxu0 0
    %562 = vmatpush2.bf16.xpose.msra.mxu0 0
    %563 = vmatprep.subr.bf16.mxu0 0
    %564 = vmatpush2.bf16.xpose.msra.mxu0 0
    %565 = vmatprep.subr.bf16.mxu0 0
    %566 = vmatpush2.bf16.xpose.msra.mxu0 0
    %567 = vmatprep.subr.bf16.mxu0 0
    %568 = vmatpush2.bf16.xpose.msra.mxu0 0
    %569 = vmatprep.subr.bf16.mxu0 0
    %570 = vmatpush2.bf16.xpose.msra.mxu0 0
    %571 = vmatprep.subr.bf16.mxu0 0
    %572 = vmatpush2.bf16.xpose.msra.mxu0 0
    %573 = vmatprep.subr.bf16.mxu0 0
    %574 = vmatpush2.bf16.xpose.msra.mxu0 0
    %575 = vmatprep.subr.bf16.mxu0 0
    %576 = vmatpush2.bf16.xpose.msra.mxu0 0
    %577 = vmatprep.mubr.bf16.mxu0 0
    %578 = vmatmul.mubr.bf16.gmra.mxu0 %v537
    %v579 = vpop.f32.mrf.mxu0
    %v580 = vadd.f32 %v534, %v579
    %v581 = vpop.f32.mrf.mxu0
    %v582 = vpop.f32.mrf.mxu0
    %v583 = vadd.f32 %v535, %v582
    %v584 = vpop.f32.mrf.mxu0
    %585 = vdwg.mxu0
    %v586 = vsel %vm175, %v580, -inf
    %587 = vmax.xlane.f32.xlu0 %v586
    %v588 = vpop.xlane.xlu0 %587
    %v589 = vsel %vm175, %v583, -inf
    %590 = vmax.xlane.f32.xlu0 %v589
    %v591 = vpop.xlane.xlu0 %590
    %v592 = vsub.f32 %v580, %v588
    %v593 = vsub.f32 %v583, %v591
    %v594 = vmul.f32 %v592, 1.442695
    %v595 = vpow.pop %v594
    %v596 = vmul.f32 %v593, 1.442695
    %v597 = vpow.pop %v596
    %v598 = vsel %vm175, %v595, 0.0
    %599 = vadd.xlane.f32.xlu0 %v598
    %v600 = vpop.xlane.xlu0 %599
    %v601 = vsel %vm175, %v597, 0.0
    %602 = vadd.xlane.f32.xlu0 %v601
    %v603 = vpop.xlane.xlu0 %602
    %v604 = vrcp.pop %v600
    %v605 = vrcp.pop %v603
    %v606 = vmul.f32 %v595, %v604
    %v607 = vmul.f32 %v597, %v605
    %v608 = vpack.c.bf16 %v607, %v606
    %v609 = vpack.c.bf16 %v514, %v513
    %v610 = vpack.c.bf16 %v516, %v515
    %v612 = vsel %vm175, %v608, 0
    %614 = vmatprep.subr.bf16.mxu0 0
    %615 = vmatpush1.bf16.msra.mxu0 0
    %616 = vmatprep.subr.bf16.mxu0 0
    %617 = vmatpush1.bf16.msra.mxu0 0
    %618 = vmatprep.subr.bf16.mxu0 0
    %619 = vmatpush1.bf16.msra.mxu0 0
    %620 = vmatprep.subr.bf16.mxu0 0
    %621 = vmatpush1.bf16.msra.mxu0 0
    %622 = vmatprep.subr.bf16.mxu0 0
    %623 = vmatpush1.bf16.msra.mxu0 0
    %624 = vmatprep.subr.bf16.mxu0 0
    %625 = vmatpush1.bf16.msra.mxu0 0
    %626 = vmatprep.subr.bf16.mxu0 0
    %627 = vmatpush1.bf16.msra.mxu0 %v610
    %628 = vmatprep.subr.bf16.mxu0 0
    %629 = vmatpush1.bf16.msra.mxu0 %v609
    %630 = vmatprep.subr.bf16.mxu0 0
    %631 = vmatpush2.bf16.msra.mxu0 0
    %632 = vmatprep.subr.bf16.mxu0 0
    %633 = vmatpush2.bf16.msra.mxu0 0
    %634 = vmatprep.subr.bf16.mxu0 0
    %635 = vmatpush2.bf16.msra.mxu0 0
    %636 = vmatprep.subr.bf16.mxu0 0
    %637 = vmatpush2.bf16.msra.mxu0 0
    %638 = vmatprep.subr.bf16.mxu0 0
    %639 = vmatpush2.bf16.msra.mxu0 0
    %640 = vmatprep.subr.bf16.mxu0 0
    %641 = vmatpush2.bf16.msra.mxu0 0
    %642 = vmatprep.subr.bf16.mxu0 0
    %643 = vmatpush2.bf16.msra.mxu0 0
    %644 = vmatprep.subr.bf16.mxu0 0
    %645 = vmatpush2.bf16.msra.mxu0 0
    %646 = vmatprep.mubr.bf16.mxu0 0
    %647 = vmatmul.mubr.bf16.gmra.mxu0 %v612
    %v648 = vpop.f32.mrf.mxu0
    %v649 = vadd.f32 0.0, %v648
    %v650 = vpop.f32.mrf.mxu0
    %v651 = vpop.f32.mrf.mxu0
    %v652 = vadd.f32 0.0, %v651
    %v653 = vpop.f32.mrf.mxu0
    %654 = vdwg.mxu0
    %v655 = vld [vmem:[%s3] sm:$0xf]
    %v656 = vld [vmem:[%s3 + $0x4] sm:$0xf]
    %v657 = vld [vmem:[%s3 + $0x8] sm:$0xf]
    %v658 = vld [vmem:[%s3 + $0xc] sm:$0xf]
    %v659 = vpack.c.bf16 %v652, %v649
    %v664 = vunpack.c.l.b16 %v655
    %v665 = vunpack.c.l.b16 %v656
    %v666 = vunpack.c.l.b16 %v657
    %v667 = vunpack.c.l.b16 %v658
    %v668 = vpack.c.b16 %v665, %v664
    %v669 = vpack.c.b16 %v667, %v666
    %v673 = vsel %vm175, %v659, 0
    %675 = vmatprep.subr.bf16.mxu0 0
    %676 = vmatpush1.bf16.msra.mxu0 0
    %677 = vmatprep.subr.bf16.mxu0 0
    %678 = vmatpush1.bf16.msra.mxu0 0
    %679 = vmatprep.subr.bf16.mxu0 0
    %680 = vmatpush1.bf16.msra.mxu0 0
    %681 = vmatprep.subr.bf16.mxu0 0
    %682 = vmatpush1.bf16.msra.mxu0 0
    %683 = vmatprep.subr.bf16.mxu0 0
    %684 = vmatpush1.bf16.msra.mxu0 0
    %685 = vmatprep.subr.bf16.mxu0 0
    %686 = vmatpush1.bf16.msra.mxu0 0
    %687 = vmatprep.subr.bf16.mxu0 0
    %688 = vmatpush1.bf16.msra.mxu0 %v669
    %689 = vmatprep.subr.bf16.mxu0 0
    %690 = vmatpush1.bf16.msra.mxu0 %v668
    %691 = vmatprep.subr.bf16.mxu0 0
    %692 = vmatpush2.bf16.msra.mxu0 0
    %693 = vmatprep.subr.bf16.mxu0 0
    %694 = vmatpush2.bf16.msra.mxu0 0
    %695 = vmatprep.subr.bf16.mxu0 0
    %696 = vmatpush2.bf16.msra.mxu0 0
    %697 = vmatprep.subr.bf16.mxu0 0
    %698 = vmatpush2.bf16.msra.mxu0 0
    %699 = vmatprep.subr.bf16.mxu0 0
    %700 = vmatpush2.bf16.msra.mxu0 0
    %701 = vmatprep.subr.bf16.mxu0 0
    %702 = vmatpush2.bf16.msra.mxu0 0
    %703 = vmatprep.subr.bf16.mxu0 0
    %704 = vmatpush2.bf16.msra.mxu0 0
    %705 = vmatprep.subr.bf16.mxu0 0
    %706 = vmatpush2.bf16.msra.mxu0 0
    %707 = vmatprep.mubr.bf16.mxu0 0
    %708 = vmatmul.mubr.bf16.gmra.mxu0 %v673
    %v709 = vpop.f32.mrf.mxu0
    %v710 = vadd.f32 0.0, %v709
    %v711 = vpop.f32.mrf.mxu0
    %v712 = vpop.f32.mrf.mxu0
    %v713 = vadd.f32 0.0, %v712
    %v714 = vpop.f32.mrf.mxu0
    %715 = vdwg.mxu0
    %v716 = vadd.f32 %v526, %v710
    %v717 = vadd.f32 %v527, %v713
    %v718 = vld [vmem:[%s10 + $0xf] sm:$0x1]
    %v719 = vlaneseq
    %v720 = vshrl.u32 %v719, 7
    %v721 = vsub.s32 0, %v720
    %v722 = vrot.slane %v718, %v721
    %v723 = vadd.f32 %v716, %v722
    %v724 = vadd.f32 %v717, %v722
    %v725 = vsel %vm175, %v723, 0.0
    %726 = vadd.xlane.f32.xlu0 %v725
    %v727 = vpop.xlane.xlu0 %726
    %v728 = vsel %vm175, %v724, 0.0
    %729 = vadd.xlane.f32.xlu0 %v728
    %v730 = vpop.xlane.xlu0 %729
    %v731 = vmul.f32 %v727, %v188
    %v732 = vmul.f32 %v730, %v188
    %v733 = vsub.f32 %v723, %v731
    %v734 = vsub.f32 %v724, %v732
    %v735 = vmul.f32 %v733, %v733
    %v736 = vmul.f32 %v734, %v734
    %v737 = vsel %vm175, %v735, 0.0
    %738 = vadd.xlane.f32.xlu0 %v737
    %v739 = vpop.xlane.xlu0 %738
    %v740 = vsel %vm175, %v736, 0.0
    %741 = vadd.xlane.f32.xlu0 %v740
    %v742 = vpop.xlane.xlu0 %741
    %v743 = vmul.f32 %v739, %v188
    %v744 = vmul.f32 %v742, %v188
    %v745 = vadd.f32 %v743, 1e-05
    %v746 = vadd.f32 %v744, 1e-05
    %v747 = vrsqrt.pop %v745
    %v748 = vrsqrt.pop %v746
    %v749 = vmul.f32 %v733, %v747
    %v750 = vmul.f32 %v734, %v748
    %v751 = vld [vmem:[%s10 + $0x4] sm:$0x1]
    %v752 = vlaneseq
    %v753 = vshrl.u32 %v752, 7
    %v754 = vsub.s32 0, %v753
    %v755 = vrot.slane %v751, %v754
    %v756 = vmul.f32 %v749, %v755
    %v757 = vmul.f32 %v750, %v755
    %v758 = vld [vmem:[%s10 + $0x5] sm:$0x1]
    %v759 = vlaneseq
    %v760 = vshrl.u32 %v759, 7
    %v761 = vsub.s32 0, %v760
    %v762 = vrot.slane %v758, %v761
    %v763 = vadd.f32 %v756, %v762
    %v764 = vadd.f32 %v757, %v762
    %v765 = vld [vmem:[%s4] sm:$0xf]
    %v766 = vld [vmem:[%s4 + $0x4] sm:$0xf]
    %v767 = vld [vmem:[%s4 + $0x8] sm:$0xf]
    %v768 = vld [vmem:[%s4 + $0xc] sm:$0xf]
    %v769 = vpack.c.bf16 %v764, %v763
    %v770 = vld [vmem:[%s10 + $0x10] sm:$0x1]
    %v771 = vlaneseq
    %v772 = vshrl.u32 %v771, 7
    %v773 = vsub.s32 0, %v772
    %v774 = vrot.slane %v770, %v773
    %v779 = vunpack.c.l.b16 %v765
    %v780 = vunpack.c.l.b16 %v766
    %v781 = vunpack.c.l.b16 %v767
    %v782 = vunpack.c.l.b16 %v768
    %v783 = vpack.c.b16 %v780, %v779
    %v784 = vpack.c.b16 %v782, %v781
    %v788 = vsel %vm175, %v769, 0
    %790 = vmatprep.subr.bf16.mxu0 0
    %791 = vmatpush1.bf16.msra.mxu0 0
    %792 = vmatprep.subr.bf16.mxu0 0
    %793 = vmatpush1.bf16.msra.mxu0 0
    %794 = vmatprep.subr.bf16.mxu0 0
    %795 = vmatpush1.bf16.msra.mxu0 0
    %796 = vmatprep.subr.bf16.mxu0 0
    %797 = vmatpush1.bf16.msra.mxu0 0
    %798 = vmatprep.subr.bf16.mxu0 0
    %799 = vmatpush1.bf16.msra.mxu0 0
    %800 = vmatprep.subr.bf16.mxu0 0
    %801 = vmatpush1.bf16.msra.mxu0 0
    %802 = vmatprep.subr.bf16.mxu0 0
    %803 = vmatpush1.bf16.msra.mxu0 %v784
    %804 = vmatprep.subr.bf16.mxu0 0
    %805 = vmatpush1.bf16.msra.mxu0 %v783
    %806 = vmatprep.subr.bf16.mxu0 0
    %807 = vmatpush2.bf16.msra.mxu0 0
    %808 = vmatprep.subr.bf16.mxu0 0
    %809 = vmatpush2.bf16.msra.mxu0 0
    %810 = vmatprep.subr.bf16.mxu0 0
    %811 = vmatpush2.bf16.msra.mxu0 0
    %812 = vmatprep.subr.bf16.mxu0 0
    %813 = vmatpush2.bf16.msra.mxu0 0
    %814 = vmatprep.subr.bf16.mxu0 0
    %815 = vmatpush2.bf16.msra.mxu0 0
    %816 = vmatprep.subr.bf16.mxu0 0
    %817 = vmatpush2.bf16.msra.mxu0 0
    %818 = vmatprep.subr.bf16.mxu0 0
    %819 = vmatpush2.bf16.msra.mxu0 0
    %820 = vmatprep.subr.bf16.mxu0 0
    %821 = vmatpush2.bf16.msra.mxu0 0
    %822 = vmatprep.mubr.bf16.mxu0 0
    %823 = vmatmul.mubr.bf16.gmra.mxu0 %v788
    %v824 = vpop.f32.mrf.mxu0
    %v825 = vadd.f32 %v774, %v824
    %v826 = vpop.f32.mrf.mxu0
    %v827 = vpop.f32.mrf.mxu0
    %v828 = vadd.f32 %v774, %v827
    %v829 = vpop.f32.mrf.mxu0
    %830 = vdwg.mxu0
    %v831 = vmul.f32 %v825, %v825
    %v832 = vmul.f32 %v828, %v828
    %v833 = vmul.f32 %v825, %v831
    %v834 = vmul.f32 %v828, %v832
    %v835 = vmul.f32 %v833, 0.044715
    %v836 = vmul.f32 %v834, 0.044715
    %v837 = vadd.f32 %v825, %v835
    %v838 = vadd.f32 %v828, %v836
    %v839 = vmul.f32 %v837, 0.7978846
    %v840 = vmul.f32 %v838, 0.7978846
    %v841 = vtanh.pop %v839
    %v842 = vtanh.pop %v840
    %v843 = vadd.f32 %v841, 1.0
    %v844 = vadd.f32 %v842, 1.0
    %v845 = vmul.f32 %v843, 0.5
    %v846 = vmul.f32 %v844, 0.5
    %v847 = vmul.f32 %v825, %v845
    %v848 = vmul.f32 %v828, %v846
    %v849 = vld [vmem:[%s5] sm:$0xf]
    %v850 = vld [vmem:[%s5 + $0x4] sm:$0xf]
    %v851 = vld [vmem:[%s5 + $0x8] sm:$0xf]
    %v852 = vld [vmem:[%s5 + $0xc] sm:$0xf]
    %v853 = vld [vmem:[%s5 + $0x10] sm:$0xf]
    %v854 = vld [vmem:[%s5 + $0x14] sm:$0xf]
    %v855 = vld [vmem:[%s5 + $0x18] sm:$0xf]
    %v856 = vld [vmem:[%s5 + $0x1c] sm:$0xf]
    %v857 = vld [vmem:[%s5 + $0x20] sm:$0xf]
    %v858 = vld [vmem:[%s5 + $0x24] sm:$0xf]
    %v859 = vld [vmem:[%s5 + $0x28] sm:$0xf]
    %v860 = vld [vmem:[%s5 + $0x2c] sm:$0xf]
    %v861 = vld [vmem:[%s5 + $0x30] sm:$0xf]
    %v862 = vld [vmem:[%s5 + $0x34] sm:$0xf]
    %v863 = vld [vmem:[%s5 + $0x38] sm:$0xf]
    %v864 = vld [vmem:[%s5 + $0x3c] sm:$0xf]
    %v865 = vpack.c.bf16 %v848, %v847
    %v882 = vunpack.c.l.b16 %v849
    %v883 = vunpack.c.l.b16 %v850
    %v884 = vunpack.c.l.b16 %v851
    %v885 = vunpack.c.l.b16 %v852
    %v886 = vunpack.c.l.b16 %v853
    %v887 = vunpack.c.l.b16 %v854
    %v888 = vunpack.c.l.b16 %v855
    %v889 = vunpack.c.l.b16 %v856
    %v890 = vunpack.c.l.b16 %v857
    %v891 = vunpack.c.l.b16 %v858
    %v892 = vunpack.c.l.b16 %v859
    %v893 = vunpack.c.l.b16 %v860
    %v894 = vunpack.c.l.b16 %v861
    %v895 = vunpack.c.l.b16 %v862
    %v896 = vunpack.c.l.b16 %v863
    %v897 = vunpack.c.l.b16 %v864
    %v898 = vpack.c.b16 %v883, %v882
    %v899 = vpack.c.b16 %v885, %v884
    %v900 = vpack.c.b16 %v887, %v886
    %v901 = vpack.c.b16 %v889, %v888
    %v902 = vpack.c.b16 %v891, %v890
    %v903 = vpack.c.b16 %v893, %v892
    %v904 = vpack.c.b16 %v895, %v894
    %v905 = vpack.c.b16 %v897, %v896
    %914 = vmatprep.subr.bf16.mxu0 0
    %915 = vmatpush1.bf16.msra.mxu0 %v905
    %916 = vmatprep.subr.bf16.mxu0 0
    %917 = vmatpush1.bf16.msra.mxu0 %v904
    %918 = vmatprep.subr.bf16.mxu0 0
    %919 = vmatpush1.bf16.msra.mxu0 %v903
    %920 = vmatprep.subr.bf16.mxu0 0
    %921 = vmatpush1.bf16.msra.mxu0 %v902
    %922 = vmatprep.subr.bf16.mxu0 0
    %923 = vmatpush1.bf16.msra.mxu0 %v901
    %924 = vmatprep.subr.bf16.mxu0 0
    %925 = vmatpush1.bf16.msra.mxu0 %v900
    %926 = vmatprep.subr.bf16.mxu0 0
    %927 = vmatpush1.bf16.msra.mxu0 %v899
    %928 = vmatprep.subr.bf16.mxu0 0
    %929 = vmatpush1.bf16.msra.mxu0 %v898
    %930 = vmatprep.subr.bf16.mxu0 0
    %931 = vmatpush2.bf16.msra.mxu0 0
    %932 = vmatprep.subr.bf16.mxu0 0
    %933 = vmatpush2.bf16.msra.mxu0 0
    %934 = vmatprep.subr.bf16.mxu0 0
    %935 = vmatpush2.bf16.msra.mxu0 0
    %936 = vmatprep.subr.bf16.mxu0 0
    %937 = vmatpush2.bf16.msra.mxu0 0
    %938 = vmatprep.subr.bf16.mxu0 0
    %939 = vmatpush2.bf16.msra.mxu0 0
    %940 = vmatprep.subr.bf16.mxu0 0
    %941 = vmatpush2.bf16.msra.mxu0 0
    %942 = vmatprep.subr.bf16.mxu0 0
    %943 = vmatpush2.bf16.msra.mxu0 0
    %944 = vmatprep.subr.bf16.mxu0 0
    %945 = vmatpush2.bf16.msra.mxu0 0
    %946 = vmatprep.mubr.bf16.mxu0 0
    %947 = vmatmul.mubr.bf16.gmra.mxu0 %v865
    %v948 = vpop.f32.mrf.mxu0
    %v949 = vadd.f32 0.0, %v948
    %v950 = vpop.f32.mrf.mxu0
    %v951 = vpop.f32.mrf.mxu0
    %v952 = vadd.f32 0.0, %v951
    %v953 = vpop.f32.mrf.mxu0
    %954 = vdwg.mxu0
    %v955 = vadd.f32 %v723, %v949
    %v956 = vadd.f32 %v724, %v952
    %v957 = vld [vmem:[%s10 + $0x11] sm:$0x1]
    %v958 = vlaneseq
    %v959 = vshrl.u32 %v958, 7
    %v960 = vsub.s32 0, %v959
    %v961 = vrot.slane %v957, %v960
    %v962 = vadd.f32 %v955, %v961
    %v963 = vadd.f32 %v956, %v961
    %964 = vst.msk [vmem:[#allocation2] sm:$0xff] %vm175, %v962
    %965 = vst.msk [vmem:[#allocation2 + $0x8] sm:$0xff] %vm175, %v963
    %v966 = vld [vmem:[%s8] sm:$0xff]
    %v967 = vld [vmem:[%s8 + $0x8] sm:$0xff]
    %v968 = vld [vmem:[%s8 + $0x10] sm:$0xff]
    %v969 = vld [vmem:[%s8 + $0x18] sm:$0xff]
    %v970 = vld [vmem:[%s8 + $0x20] sm:$0xff]
    %v971 = vld [vmem:[%s8 + $0x28] sm:$0xff]
    %v972 = vld [vmem:[%s8 + $0x30] sm:$0xff]
    %v973 = vld [vmem:[%s8 + $0x38] sm:$0xff]
    %v975 = vsel %vm175, %v962, 0
    %v978 = vsel %vm175, %v963, 0
    %v981 = vsel %vm175, %v966, 0
    %v984 = vsel %vm175, %v967, 0
    %v987 = vsel %vm175, %v968, 0
    %v990 = vsel %vm175, %v969, 0
    %v993 = vsel %vm175, %v970, 0
    %v996 = vsel %vm175, %v971, 0
    %v999 = vsel %vm175, %v972, 0
    %v1002 = vsel %vm175, %v973, 0
    %1004 = vmatprep.subr.mxu0 0.0
    %1005 = vmatpush1.xpose.msra.mxu0 0.0
    %1006 = vmatprep.subr.mxu0 0.0
    %1007 = vmatpush1.xpose.msra.mxu0 0.0
    %1008 = vmatprep.subr.mxu0 0.0
    %1009 = vmatpush1.xpose.msra.mxu0 0.0
    %1010 = vmatprep.subr.mxu0 0.0
    %1011 = vmatpush1.xpose.msra.mxu0 0.0
    %1012 = vmatprep.subr.mxu0 0.0
    %1013 = vmatpush1.xpose.msra.mxu0 0.0
    %1014 = vmatprep.subr.mxu0 0.0
    %1015 = vmatpush1.xpose.msra.mxu0 0.0
    %1016 = vmatprep.subr.mxu0 0.0
    %1017 = vmatpush1.xpose.msra.mxu0 0.0
    %1018 = vmatprep.subr.mxu0 0.0
    %1019 = vmatpush1.xpose.msra.mxu0 0.0
    %1020 = vmatprep.subr.mxu0 0.0
    %1021 = vmatpush1.xpose.msra.mxu0 %v1002
    %1022 = vmatprep.subr.mxu0 0.0
    %1023 = vmatpush1.xpose.msra.mxu0 %v999
    %1024 = vmatprep.subr.mxu0 0.0
    %1025 = vmatpush1.xpose.msra.mxu0 %v996
    %1026 = vmatprep.subr.mxu0 0.0
    %1027 = vmatpush1.xpose.msra.mxu0 %v993
    %1028 = vmatprep.subr.mxu0 0.0
    %1029 = vmatpush1.xpose.msra.mxu0 %v990
    %1030 = vmatprep.subr.mxu0 0.0
    %1031 = vmatpush1.xpose.msra.mxu0 %v987
    %1032 = vmatprep.subr.mxu0 0.0
    %1033 = vmatpush1.xpose.msra.mxu0 %v984
    %1034 = vmatprep.subr.mxu0 0.0
    %1035 = vmatpush1.xpose.msra.mxu0 %v981
    %1036 = vmatprep.subr.mxu0 0.0
    %1037 = vmatpush2.xpose.msra.mxu0 0.0
    %1038 = vmatprep.subr.mxu0 0.0
    %1039 = vmatpush2.xpose.msra.mxu0 0.0
    %1040 = vmatprep.subr.mxu0 0.0
    %1041 = vmatpush2.xpose.msra.mxu0 0.0
    %1042 = vmatprep.subr.mxu0 0.0
    %1043 = vmatpush2.xpose.msra.mxu0 0.0
    %1044 = vmatprep.subr.mxu0 0.0
    %1045 = vmatpush2.xpose.msra.mxu0 0.0
    %1046 = vmatprep.subr.mxu0 0.0
    %1047 = vmatpush2.xpose.msra.mxu0 0.0
    %1048 = vmatprep.subr.mxu0 0.0
    %1049 = vmatpush2.xpose.msra.mxu0 0.0
    %1050 = vmatprep.subr.mxu0 0.0
    %1051 = vmatpush2.xpose.msra.mxu0 0.0
    %1052 = vmatprep.subr.mxu0 0.0
    %1053 = vmatpush2.xpose.msra.mxu0 0.0
    %1054 = vmatprep.subr.mxu0 0.0
    %1055 = vmatpush2.xpose.msra.mxu0 0.0
    %1056 = vmatprep.subr.mxu0 0.0
    %1057 = vmatpush2.xpose.msra.mxu0 0.0
    %1058 = vmatprep.subr.mxu0 0.0
    %1059 = vmatpush2.xpose.msra.mxu0 0.0
    %1060 = vmatprep.subr.mxu0 0.0
    %1061 = vmatpush2.xpose.msra.mxu0 0.0
    %1062 = vmatprep.subr.mxu0 0.0
    %1063 = vmatpush2.xpose.msra.mxu0 0.0
    %1064 = vmatprep.subr.mxu0 0.0
    %1065 = vmatpush2.xpose.msra.mxu0 0.0
    %1066 = vmatprep.subr.mxu0 0.0
    %1067 = vmatpush2.xpose.msra.mxu0 0.0
    %1068 = vmatprep.mubr.f32.mxu0 0.0
    %1069 = vmatmul.mubr.f32.gmra.mxu0 %v975
    %v1070 = vpop.f32.mrf.mxu0
    %v1071 = vadd.f32 0.0, %v1070
    %v1072 = vpop.f32.mrf.mxu0
    %1073 = vmatprep.mubr.f32.mxu0 0.0
    %1074 = vmatmul.mubr.f32.gmra.mxu0 %v978
    %v1075 = vpop.f32.mrf.mxu0
    %v1076 = vadd.f32 0.0, %v1075
    %v1077 = vpop.f32.mrf.mxu0
    %1078 = vdwg.mxu0
    %v1079 = vld [vmem:[%s10 + $0x18] sm:$0x1]
    %v1080 = vmul.f32 %v1071, 2.0
    %v1081 = vmul.f32 %v1076, 2.0
    %v1082 = vlaneseq
    %v1083 = vshrl.u32 %v1082, 7
    %v1084 = vsub.s32 0, %v1083
    %v1085 = vrot.slane %v1079, %v1084
    %v1086 = vsub.f32 %v1085, %v1080
    %v1087 = vsub.f32 %v1085, %v1081
    %v1088 = vsel %vm97, %v1086, inf
    %1089 = vmin.xlane.f32.xlu0 %v1088
    %v1090 = vpop.xlane.xlu0 %1089
    %v1091 = vsel %vm97, %v1087, inf
    %1092 = vmin.xlane.f32.xlu0 %v1091
    %v1093 = vpop.xlane.xlu0 %1092
    %v1094 = vlaneseq
    %v1095 = vand.u32 %v1094, 127
    %vm1096 = vcmp.le.f32.partialorder %v1086, %v1090
    %vm1097 = vcmp.le.f32.partialorder %v1087, %v1093
    %v1098 = vsel %vm1096, %v1095, 64
    %v1099 = vsel %vm1097, %v1095, 64
    %v1100 = vsel %vm97, %v1098, 2147483647
    %v1101 = vand.u32 %v1100, 65535
    %v1102 = vshra.s32 %v1100, 16
    %v1103 = vcvt.s32.f32 %v1101
    %v1104 = vcvt.s32.f32 %v1102
    %1105 = vmin.xlane.f32.xlu0 %v1104
    %v1106 = vpop.xlane.xlu0 %1105
    %vm1107 = vcmp.eq.f32.partialorder %v1104, %v1106
    %v1108 = vsel %vm1107, %v1103, inf
    %1109 = vmin.xlane.f32.xlu0 %v1108
    %v1110 = vpop.xlane.xlu0 %1109
    %v1111 = vcvt.f32.s32 %v1110
    %v1112 = vcvt.f32.s32 %v1106
    %v1113 = vshll.u32 %v1112, 16
    %v1114 = vadd.s32 %v1113, %v1111
    %v1115 = vsel %vm97, %v1099, 2147483647
    %v1116 = vand.u32 %v1115, 65535
    %v1117 = vshra.s32 %v1115, 16
    %v1118 = vcvt.s32.f32 %v1116
    %v1119 = vcvt.s32.f32 %v1117
    %1120 = vmin.xlane.f32.xlu0 %v1119
    %v1121 = vpop.xlane.xlu0 %1120
    %vm1122 = vcmp.eq.f32.partialorder %v1119, %v1121
    %v1123 = vsel %vm1122, %v1118, inf
    %1124 = vmin.xlane.f32.xlu0 %v1123
    %v1125 = vpop.xlane.xlu0 %1124
    %v1126 = vcvt.f32.s32 %v1125
    %v1127 = vcvt.f32.s32 %v1121
    %v1128 = vshll.u32 %v1127, 16
    %v1129 = vadd.s32 %v1128, %v1126
    %vm1130 = vcmask 7168
    %1131 = vst.msk [vmem:[%s11] sm:$0xff] %vm1130, %v1114
    %1132 = vst.msk [vmem:[%s11 + $0x8] sm:$0xff] %vm1130, %v1129
    %vm1133 = vcmp.eq.s32.totalorder %v1095, %v1114
    %vm1134 = vcmp.eq.s32.totalorder %v1095, %v1129
    %v1135 = vsel %vm1133, 1, 0
    %v1136 = vsel %vm1134, 1, 0
    %v1137 = vcvt.s32.f32 %v1135
    %v1138 = vcvt.s32.f32 %v1136
    %v1139 = vpack.c.bf16 %v1138, %v1137
    %v1140 = vld [vmem:[%s6] sm:$0xff]
    %v1141 = vld [vmem:[%s6 + $0x8] sm:$0xff]
    %v1142 = vld [vmem:[%s6 + $0x10] sm:$0xff]
    %v1143 = vld [vmem:[%s6 + $0x18] sm:$0xff]
    %v1144 = vld [vmem:[%s6 + $0x20] sm:$0xff]
    %v1145 = vld [vmem:[%s6 + $0x28] sm:$0xff]
    %v1146 = vld [vmem:[%s6 + $0x30] sm:$0xff]
    %v1147 = vld [vmem:[%s6 + $0x38] sm:$0xff]
    %v1156 = vunpack.c.l.b16 %v1140
    %v1157 = vunpack.c.h.b16 %v1140
    %v1158 = vunpack.c.l.b16 %v1141
    %v1159 = vunpack.c.h.b16 %v1141
    %v1160 = vunpack.c.l.b16 %v1142
    %v1161 = vunpack.c.h.b16 %v1142
    %v1162 = vunpack.c.l.b16 %v1143
    %v1163 = vunpack.c.h.b16 %v1143
    %v1164 = vunpack.c.l.b16 %v1144
    %v1165 = vunpack.c.h.b16 %v1144
    %v1166 = vunpack.c.l.b16 %v1145
    %v1167 = vunpack.c.h.b16 %v1145
    %v1168 = vunpack.c.l.b16 %v1146
    %v1169 = vunpack.c.h.b16 %v1146
    %v1170 = vunpack.c.l.b16 %v1147
    %v1171 = vunpack.c.h.b16 %v1147
    %v1172 = vpack.c.b16 %v1158, %v1156
    %v1173 = vpack.c.b16 %v1159, %v1157
    %v1174 = vpack.c.b16 %v1162, %v1160
    %v1175 = vpack.c.b16 %v1163, %v1161
    %v1176 = vpack.c.b16 %v1166, %v1164
    %v1177 = vpack.c.b16 %v1167, %v1165
    %v1178 = vpack.c.b16 %v1170, %v1168
    %v1179 = vpack.c.b16 %v1171, %v1169
    %v1189 = vsel %vm97, %v1139, 0
    %1191 = vmatprep.subr.bf16.mxu0 0
    %1192 = vmatpush1.bf16.msra.mxu0 0
    %1193 = vmatprep.subr.bf16.mxu0 0
    %1194 = vmatpush1.bf16.msra.mxu0 0
    %1195 = vmatprep.subr.bf16.mxu0 0
    %1196 = vmatpush1.bf16.msra.mxu0 0
    %1197 = vmatprep.subr.bf16.mxu0 0
    %1198 = vmatpush1.bf16.msra.mxu0 0
    %1199 = vmatprep.subr.bf16.mxu0 %v1179
    %1200 = vmatpush1.bf16.msra.mxu0 %v1178
    %1201 = vmatprep.subr.bf16.mxu0 %v1177
    %1202 = vmatpush1.bf16.msra.mxu0 %v1176
    %1203 = vmatprep.subr.bf16.mxu0 %v1175
    %1204 = vmatpush1.bf16.msra.mxu0 %v1174
    %1205 = vmatprep.subr.bf16.mxu0 %v1173
    %1206 = vmatpush1.bf16.msra.mxu0 %v1172
    %1207 = vmatprep.subr.bf16.mxu0 0
    %1208 = vmatpush2.bf16.msra.mxu0 0
    %1209 = vmatprep.subr.bf16.mxu0 0
    %1210 = vmatpush2.bf16.msra.mxu0 0
    %1211 = vmatprep.subr.bf16.mxu0 0
    %1212 = vmatpush2.bf16.msra.mxu0 0
    %1213 = vmatprep.subr.bf16.mxu0 0
    %1214 = vmatpush2.bf16.msra.mxu0 0
    %1215 = vmatprep.subr.bf16.mxu0 0
    %1216 = vmatpush2.bf16.msra.mxu0 0
    %1217 = vmatprep.subr.bf16.mxu0 0
    %1218 = vmatpush2.bf16.msra.mxu0 0
    %1219 = vmatprep.subr.bf16.mxu0 0
    %1220 = vmatpush2.bf16.msra.mxu0 0
    %1221 = vmatprep.subr.bf16.mxu0 0
    %1222 = vmatpush2.bf16.msra.mxu0 0
    %1223 = vmatprep.mubr.bf16.mxu0 0
    %1224 = vmatmul.mubr.bf16.gmra.mxu0 %v1189
    %v1225 = vpop.f32.mrf.mxu0
    %v1226 = vadd.f32 0.0, %v1225
    %v1227 = vpop.f32.mrf.mxu0
    %v1228 = vadd.f32 0.0, %v1227
    %v1229 = vpop.f32.mrf.mxu0
    %v1230 = vadd.f32 0.0, %v1229
    %v1231 = vpop.f32.mrf.mxu0
    %v1232 = vadd.f32 0.0, %v1231
    %1233 = vdwg.mxu0
    %v1234 = vld [vmem:[%s10 + $0x12] sm:$0x1]
    %v1235 = vlaneseq
    %v1236 = vshrl.u32 %v1235, 7
    %v1237 = vsub.s32 0, %v1236
    %v1238 = vrot.slane %v1234, %v1237
    %v1239 = vadd.f32 %v1226, %v1238
    %v1240 = vadd.f32 %v1230, %v1238
    %v1241 = vld [vmem:[%s10 + $0x13] sm:$0x1]
    %v1242 = vlaneseq
    %v1243 = vshrl.u32 %v1242, 7
    %v1244 = vsub.s32 0, %v1243
    %v1245 = vrot.slane %v1241, %v1244
    %v1246 = vadd.f32 %v1228, %v1245
    %v1247 = vadd.f32 %v1232, %v1245
    %v1248 = vpack.c.bf16 %v523, %v522
    %v1249 = vpack.c.bf16 %v525, %v524
    %v1250 = vpack.c.bf16 %v1240, %v1239
    %v1251 = vld [vmem:[%s10 + $0x30] sm:$0xff]
    %v1252 = vld [vmem:[%s10 + $0x38] sm:$0xff]
    %v1253 = vld [vmem:[%s10 + $0x40] sm:$0xff]
    %v1254 = vld [vmem:[%s10 + $0x48] sm:$0xff]
    %v1256 = vsel %vm175, %v1248, 0
    %v1259 = vsel %vm175, %v1249, 0
    %v1262 = vsel %vm175, %v1250, 0
    %1264 = vmatprep.subr.bf16.mxu0 0
    %1265 = vmatpush1.bf16.xpose.msra.mxu0 0
    %1266 = vmatprep.subr.bf16.mxu0 0
    %1267 = vmatpush1.bf16.xpose.msra.mxu0 0
    %1268 = vmatprep.subr.bf16.mxu0 0
    %1269 = vmatpush1.bf16.xpose.msra.mxu0 0
    %1270 = vmatprep.subr.bf16.mxu0 0
    %1271 = vmatpush1.bf16.xpose.msra.mxu0 0
    %1272 = vmatprep.subr.bf16.mxu0 0
    %1273 = vmatpush1.bf16.xpose.msra.mxu0 0
    %1274 = vmatprep.subr.bf16.mxu0 0
    %1275 = vmatpush1.bf16.xpose.msra.mxu0 0
    %1276 = vmatprep.subr.bf16.mxu0 0
    %1277 = vmatpush1.bf16.xpose.msra.mxu0 0
    %1278 = vmatprep.subr.bf16.mxu0 0
    %1279 = vmatpush1.bf16.xpose.msra.mxu0 %v1262
    %1280 = vmatprep.subr.bf16.mxu0 0
    %1281 = vmatpush2.bf16.xpose.msra.mxu0 0
    %1282 = vmatprep.subr.bf16.mxu0 0
    %1283 = vmatpush2.bf16.xpose.msra.mxu0 0
    %1284 = vmatprep.subr.bf16.mxu0 0
    %1285 = vmatpush2.bf16.xpose.msra.mxu0 0
    %1286 = vmatprep.subr.bf16.mxu0 0
    %1287 = vmatpush2.bf16.xpose.msra.mxu0 0
    %1288 = vmatprep.subr.bf16.mxu0 0
    %1289 = vmatpush2.bf16.xpose.msra.mxu0 0
    %1290 = vmatprep.subr.bf16.mxu0 0
    %1291 = vmatpush2.bf16.xpose.msra.mxu0 0
    %1292 = vmatprep.subr.bf16.mxu0 0
    %1293 = vmatpush2.bf16.xpose.msra.mxu0 0
    %1294 = vmatprep.subr.bf16.mxu0 0
    %1295 = vmatpush2.bf16.xpose.msra.mxu0 0
    %1296 = vmatprep.mubr.bf16.mxu0 0
    %1297 = vmatmul.mubr.bf16.gmra.mxu0 %v1256
    %v1298 = vpop.f32.mrf.mxu0
    %v1299 = vadd.f32 %v1251, %v1298
    %v1300 = vpop.f32.mrf.mxu0
    %v1301 = vpop.f32.mrf.mxu0
    %v1302 = vadd.f32 %v1252, %v1301
    %v1303 = vpop.f32.mrf.mxu0
    %1304 = vmatprep.mubr.bf16.mxu0 0
    %1305 = vmatmul.mubr.bf16.gmra.mxu0 %v1259
    %v1306 = vpop.f32.mrf.mxu0
    %v1307 = vadd.f32 %v1253, %v1306
    %v1308 = vpop.f32.mrf.mxu0
    %v1309 = vpop.f32.mrf.mxu0
    %v1310 = vadd.f32 %v1254, %v1309
    %v1311 = vpop.f32.mrf.mxu0
    %1312 = vdwg.mxu0
    %vm1313 = vcmask 130048
    %v1314 = vsel %vm1313, %v1299, -inf
    %1315 = vmax.xlane.f32.xlu0 %v1314
    %v1316 = vpop.xlane.xlu0 %1315
    %v1317 = vsel %vm1313, %v1302, -inf
    %1318 = vmax.xlane.f32.xlu0 %v1317
    %v1319 = vpop.xlane.xlu0 %1318
    %v1320 = vsel %vm1313, %v1307, -inf
    %1321 = vmax.xlane.f32.xlu0 %v1320
    %v1322 = vpop.xlane.xlu0 %1321
    %v1323 = vsel %vm1313, %v1310, -inf
    %1324 = vmax.xlane.f32.xlu0 %v1323
    %v1325 = vpop.xlane.xlu0 %1324
    %v1326 = vsub.f32 %v1299, %v1316
    %v1327 = vsub.f32 %v1302, %v1319
    %v1328 = vsub.f32 %v1307, %v1322
    %v1329 = vsub.f32 %v1310, %v1325
    %v1330 = vmul.f32 %v1326, 1.442695
    %v1331 = vpow.pop %v1330
    %v1332 = vmul.f32 %v1327, 1.442695
    %v1333 = vpow.pop %v1332
    %v1334 = vmul.f32 %v1328, 1.442695
    %v1335 = vpow.pop %v1334
    %v1336 = vmul.f32 %v1329, 1.442695
    %v1337 = vpow.pop %v1336
    %v1338 = vsel %vm1313, %v1331, 0.0
    %1339 = vadd.xlane.f32.xlu0 %v1338
    %v1340 = vpop.xlane.xlu0 %1339
    %v1341 = vsel %vm1313, %v1333, 0.0
    %1342 = vadd.xlane.f32.xlu0 %v1341
    %v1343 = vpop.xlane.xlu0 %1342
    %v1344 = vsel %vm1313, %v1335, 0.0
    %1345 = vadd.xlane.f32.xlu0 %v1344
    %v1346 = vpop.xlane.xlu0 %1345
    %v1347 = vsel %vm1313, %v1337, 0.0
    %1348 = vadd.xlane.f32.xlu0 %v1347
    %v1349 = vpop.xlane.xlu0 %1348
    %v1350 = vrcp.pop %v1340
    %v1351 = vrcp.pop %v1343
    %v1352 = vrcp.pop %v1346
    %v1353 = vrcp.pop %v1349
    %v1354 = vmul.f32 %v1331, %v1350
    %v1355 = vmul.f32 %v1333, %v1351
    %v1356 = vmul.f32 %v1335, %v1352
    %v1357 = vmul.f32 %v1337, %v1353
    %v1358 = vpack.c.bf16 %v1355, %v1354
    %v1359 = vpack.c.bf16 %v1357, %v1356
    %v1360 = vpack.c.bf16 %v1247, %v1246
    %v1362 = vsel %vm1313, %v1358, 0
    %v1365 = vsel %vm1313, %v1359, 0
    %1367 = vmatprep.subr.bf16.mxu0 0
    %1368 = vmatpush1.bf16.msra.mxu0 0
    %1369 = vmatprep.subr.bf16.mxu0 0
    %1370 = vmatpush1.bf16.msra.mxu0 0
    %1371 = vmatprep.subr.bf16.mxu0 0
    %1372 = vmatpush1.bf16.msra.mxu0 0
    %1373 = vmatprep.subr.bf16.mxu0 0
    %1374 = vmatpush1.bf16.msra.mxu0 0
    %1375 = vmatprep.subr.bf16.mxu0 0
    %1376 = vmatpush1.bf16.msra.mxu0 0
    %1377 = vmatprep.subr.bf16.mxu0 0
    %1378 = vmatpush1.bf16.msra.mxu0 0
    %1379 = vmatprep.subr.bf16.mxu0 0
    %1380 = vmatpush1.bf16.msra.mxu0 0
    %1381 = vmatprep.subr.bf16.mxu0 0
    %1382 = vmatpush1.bf16.msra.mxu0 %v1360
    %1383 = vmatprep.subr.bf16.mxu0 0
    %1384 = vmatpush2.bf16.msra.mxu0 0
    %1385 = vmatprep.subr.bf16.mxu0 0
    %1386 = vmatpush2.bf16.msra.mxu0 0
    %1387 = vmatprep.subr.bf16.mxu0 0
    %1388 = vmatpush2.bf16.msra.mxu0 0
    %1389 = vmatprep.subr.bf16.mxu0 0
    %1390 = vmatpush2.bf16.msra.mxu0 0
    %1391 = vmatprep.subr.bf16.mxu0 0
    %1392 = vmatpush2.bf16.msra.mxu0 0
    %1393 = vmatprep.subr.bf16.mxu0 0
    %1394 = vmatpush2.bf16.msra.mxu0 0
    %1395 = vmatprep.subr.bf16.mxu0 0
    %1396 = vmatpush2.bf16.msra.mxu0 0
    %1397 = vmatprep.subr.bf16.mxu0 0
    %1398 = vmatpush2.bf16.msra.mxu0 0
    %1399 = vmatprep.mubr.bf16.mxu0 0
    %1400 = vmatmul.mubr.bf16.gmra.mxu0 %v1362
    %v1401 = vpop.f32.mrf.mxu0
    %v1402 = vadd.f32 0.0, %v1401
    %v1403 = vpop.f32.mrf.mxu0
    %v1404 = vpop.f32.mrf.mxu0
    %v1405 = vadd.f32 0.0, %v1404
    %v1406 = vpop.f32.mrf.mxu0
    %1407 = vmatprep.mubr.bf16.mxu0 0
    %1408 = vmatmul.mubr.bf16.gmra.mxu0 %v1365
    %v1409 = vpop.f32.mrf.mxu0
    %v1410 = vadd.f32 0.0, %v1409
    %v1411 = vpop.f32.mrf.mxu0
    %v1412 = vpop.f32.mrf.mxu0
    %v1413 = vadd.f32 0.0, %v1412
    %v1414 = vpop.f32.mrf.mxu0
    %1415 = vdwg.mxu0
    %s1416 = scalar_lea.vmem %s3, 16
    %v1417 = vld [vmem:[%s1416] sm:$0xf]
    %v1418 = vld [vmem:[%s1416 + $0x4] sm:$0xf]
    %v1419 = vld [vmem:[%s1416 + $0x8] sm:$0xf]
    %v1420 = vld [vmem:[%s1416 + $0xc] sm:$0xf]
    %v1421 = vpack.c.bf16 %v1405, %v1402
    %v1422 = vpack.c.bf16 %v1413, %v1410
    %v1427 = vunpack.c.l.b16 %v1417
    %v1428 = vunpack.c.l.b16 %v1418
    %v1429 = vunpack.c.l.b16 %v1419
    %v1430 = vunpack.c.l.b16 %v1420
    %v1431 = vpack.c.b16 %v1428, %v1427
    %v1432 = vpack.c.b16 %v1430, %v1429
    %v1436 = vsel %vm175, %v1421, 0
    %v1439 = vsel %vm175, %v1422, 0
    %1441 = vmatprep.subr.bf16.mxu0 0
    %1442 = vmatpush1.bf16.msra.mxu0 0
    %1443 = vmatprep.subr.bf16.mxu0 0
    %1444 = vmatpush1.bf16.msra.mxu0 0
    %1445 = vmatprep.subr.bf16.mxu0 0
    %1446 = vmatpush1.bf16.msra.mxu0 0
    %1447 = vmatprep.subr.bf16.mxu0 0
    %1448 = vmatpush1.bf16.msra.mxu0 0
    %1449 = vmatprep.subr.bf16.mxu0 0
    %1450 = vmatpush1.bf16.msra.mxu0 0
    %1451 = vmatprep.subr.bf16.mxu0 0
    %1452 = vmatpush1.bf16.msra.mxu0 0
    %1453 = vmatprep.subr.bf16.mxu0 0
    %1454 = vmatpush1.bf16.msra.mxu0 %v1432
    %1455 = vmatprep.subr.bf16.mxu0 0
    %1456 = vmatpush1.bf16.msra.mxu0 %v1431
    %1457 = vmatprep.subr.bf16.mxu0 0
    %1458 = vmatpush2.bf16.msra.mxu0 0
    %1459 = vmatprep.subr.bf16.mxu0 0
    %1460 = vmatpush2.bf16.msra.mxu0 0
    %1461 = vmatprep.subr.bf16.mxu0 0
    %1462 = vmatpush2.bf16.msra.mxu0 0
    %1463 = vmatprep.subr.bf16.mxu0 0
    %1464 = vmatpush2.bf16.msra.mxu0 0
    %1465 = vmatprep.subr.bf16.mxu0 0
    %1466 = vmatpush2.bf16.msra.mxu0 0
    %1467 = vmatprep.subr.bf16.mxu0 0
    %1468 = vmatpush2.bf16.msra.mxu0 0
    %1469 = vmatprep.subr.bf16.mxu0 0
    %1470 = vmatpush2.bf16.msra.mxu0 0
    %1471 = vmatprep.subr.bf16.mxu0 0
    %1472 = vmatpush2.bf16.msra.mxu0 0
    %1473 = vmatprep.mubr.bf16.mxu0 0
    %1474 = vmatmul.mubr.bf16.gmra.mxu0 %v1436
    %v1475 = vpop.f32.mrf.mxu0
    %v1476 = vadd.f32 0.0, %v1475
    %v1477 = vpop.f32.mrf.mxu0
    %v1478 = vpop.f32.mrf.mxu0
    %v1479 = vadd.f32 0.0, %v1478
    %v1480 = vpop.f32.mrf.mxu0
    %1481 = vmatprep.mubr.bf16.mxu0 0
    %1482 = vmatmul.mubr.bf16.gmra.mxu0 %v1439
    %v1483 = vpop.f32.mrf.mxu0
    %v1484 = vadd.f32 0.0, %v1483
    %v1485 = vpop.f32.mrf.mxu0
    %v1486 = vpop.f32.mrf.mxu0
    %v1487 = vadd.f32 0.0, %v1486
    %v1488 = vpop.f32.mrf.mxu0
    %1489 = vdwg.mxu0
    %v1490 = vadd.f32 %v171, %v1476
    %v1491 = vadd.f32 %v172, %v1479
    %v1492 = vadd.f32 %v173, %v1484
    %v1493 = vadd.f32 %v174, %v1487
    %v1494 = vld [vmem:[%s10 + $0x14] sm:$0x1]
    %v1495 = vlaneseq
    %v1496 = vshrl.u32 %v1495, 7
    %v1497 = vsub.s32 0, %v1496
    %v1498 = vrot.slane %v1494, %v1497
    %v1499 = vadd.f32 %v1490, %v1498
    %v1500 = vadd.f32 %v1491, %v1498
    %v1501 = vadd.f32 %v1492, %v1498
    %v1502 = vadd.f32 %v1493, %v1498
    %v1503 = vsel %vm175, %v1499, 0.0
    %1504 = vadd.xlane.f32.xlu0 %v1503
    %v1505 = vpop.xlane.xlu0 %1504
    %v1506 = vsel %vm175, %v1500, 0.0
    %1507 = vadd.xlane.f32.xlu0 %v1506
    %v1508 = vpop.xlane.xlu0 %1507
    %v1509 = vsel %vm175, %v1501, 0.0
    %1510 = vadd.xlane.f32.xlu0 %v1509
    %v1511 = vpop.xlane.xlu0 %1510
    %v1512 = vsel %vm175, %v1502, 0.0
    %1513 = vadd.xlane.f32.xlu0 %v1512
    %v1514 = vpop.xlane.xlu0 %1513
    %v1515 = vmul.f32 %v1505, %v188
    %v1516 = vmul.f32 %v1508, %v188
    %v1517 = vmul.f32 %v1511, %v188
    %v1518 = vmul.f32 %v1514, %v188
    %v1519 = vsub.f32 %v1499, %v1515
    %v1520 = vsub.f32 %v1500, %v1516
    %v1521 = vsub.f32 %v1501, %v1517
    %v1522 = vsub.f32 %v1502, %v1518
    %v1523 = vmul.f32 %v1519, %v1519
    %v1524 = vmul.f32 %v1520, %v1520
    %v1525 = vmul.f32 %v1521, %v1521
    %v1526 = vmul.f32 %v1522, %v1522
    %v1527 = vsel %vm175, %v1523, 0.0
    %1528 = vadd.xlane.f32.xlu0 %v1527
    %v1529 = vpop.xlane.xlu0 %1528
    %v1530 = vsel %vm175, %v1524, 0.0
    %1531 = vadd.xlane.f32.xlu0 %v1530
    %v1532 = vpop.xlane.xlu0 %1531
    %v1533 = vsel %vm175, %v1525, 0.0
    %1534 = vadd.xlane.f32.xlu0 %v1533
    %v1535 = vpop.xlane.xlu0 %1534
    %v1536 = vsel %vm175, %v1526, 0.0
    %1537 = vadd.xlane.f32.xlu0 %v1536
    %v1538 = vpop.xlane.xlu0 %1537
    %v1539 = vmul.f32 %v1529, %v188
    %v1540 = vmul.f32 %v1532, %v188
    %v1541 = vmul.f32 %v1535, %v188
    %v1542 = vmul.f32 %v1538, %v188
    %v1543 = vadd.f32 %v1539, 1e-05
    %v1544 = vadd.f32 %v1540, 1e-05
    %v1545 = vadd.f32 %v1541, 1e-05
    %v1546 = vadd.f32 %v1542, 1e-05
    %v1547 = vrsqrt.pop %v1543
    %v1548 = vrsqrt.pop %v1544
    %v1549 = vrsqrt.pop %v1545
    %v1550 = vrsqrt.pop %v1546
    %v1551 = vmul.f32 %v1519, %v1547
    %v1552 = vmul.f32 %v1520, %v1548
    %v1553 = vmul.f32 %v1521, %v1549
    %v1554 = vmul.f32 %v1522, %v1550
    %v1555 = vld [vmem:[%s10 + $0x8] sm:$0x1]
    %v1556 = vlaneseq
    %v1557 = vshrl.u32 %v1556, 7
    %v1558 = vsub.s32 0, %v1557
    %v1559 = vrot.slane %v1555, %v1558
    %v1560 = vmul.f32 %v1551, %v1559
    %v1561 = vmul.f32 %v1552, %v1559
    %v1562 = vmul.f32 %v1553, %v1559
    %v1563 = vmul.f32 %v1554, %v1559
    %v1564 = vld [vmem:[%s10 + $0x9] sm:$0x1]
    %v1565 = vlaneseq
    %v1566 = vshrl.u32 %v1565, 7
    %v1567 = vsub.s32 0, %v1566
    %v1568 = vrot.slane %v1564, %v1567
    %v1569 = vadd.f32 %v1560, %v1568
    %v1570 = vadd.f32 %v1561, %v1568
    %v1571 = vadd.f32 %v1562, %v1568
    %v1572 = vadd.f32 %v1563, %v1568
    %s1573 = scalar_lea.vmem %s4, 16
    %v1574 = vld [vmem:[%s1573] sm:$0xf]
    %v1575 = vld [vmem:[%s1573 + $0x4] sm:$0xf]
    %v1576 = vld [vmem:[%s1573 + $0x8] sm:$0xf]
    %v1577 = vld [vmem:[%s1573 + $0xc] sm:$0xf]
    %v1578 = vpack.c.bf16 %v1570, %v1569
    %v1579 = vpack.c.bf16 %v1572, %v1571
    %v1580 = vld [vmem:[%s10 + $0x15] sm:$0x1]
    %v1581 = vlaneseq
    %v1582 = vshrl.u32 %v1581, 7
    %v1583 = vsub.s32 0, %v1582
    %v1584 = vrot.slane %v1580, %v1583
    %v1589 = vunpack.c.l.b16 %v1574
    %v1590 = vunpack.c.l.b16 %v1575
    %v1591 = vunpack.c.l.b16 %v1576
    %v1592 = vunpack.c.l.b16 %v1577
    %v1593 = vpack.c.b16 %v1590, %v1589
    %v1594 = vpack.c.b16 %v1592, %v1591
    %v1598 = vsel %vm175, %v1578, 0
    %v1601 = vsel %vm175, %v1579, 0
    %1603 = vmatprep.subr.bf16.mxu0 0
    %1604 = vmatpush1.bf16.msra.mxu0 0
    %1605 = vmatprep.subr.bf16.mxu0 0
    %1606 = vmatpush1.bf16.msra.mxu0 0
    %1607 = vmatprep.subr.bf16.mxu0 0
    %1608 = vmatpush1.bf16.msra.mxu0 0
    %1609 = vmatprep.subr.bf16.mxu0 0
    %1610 = vmatpush1.bf16.msra.mxu0 0
    %1611 = vmatprep.subr.bf16.mxu0 0
    %1612 = vmatpush1.bf16.msra.mxu0 0
    %1613 = vmatprep.subr.bf16.mxu0 0
    %1614 = vmatpush1.bf16.msra.mxu0 0
    %1615 = vmatprep.subr.bf16.mxu0 0
    %1616 = vmatpush1.bf16.msra.mxu0 %v1594
    %1617 = vmatprep.subr.bf16.mxu0 0
    %1618 = vmatpush1.bf16.msra.mxu0 %v1593
    %1619 = vmatprep.subr.bf16.mxu0 0
    %1620 = vmatpush2.bf16.msra.mxu0 0
    %1621 = vmatprep.subr.bf16.mxu0 0
    %1622 = vmatpush2.bf16.msra.mxu0 0
    %1623 = vmatprep.subr.bf16.mxu0 0
    %1624 = vmatpush2.bf16.msra.mxu0 0
    %1625 = vmatprep.subr.bf16.mxu0 0
    %1626 = vmatpush2.bf16.msra.mxu0 0
    %1627 = vmatprep.subr.bf16.mxu0 0
    %1628 = vmatpush2.bf16.msra.mxu0 0
    %1629 = vmatprep.subr.bf16.mxu0 0
    %1630 = vmatpush2.bf16.msra.mxu0 0
    %1631 = vmatprep.subr.bf16.mxu0 0
    %1632 = vmatpush2.bf16.msra.mxu0 0
    %1633 = vmatprep.subr.bf16.mxu0 0
    %1634 = vmatpush2.bf16.msra.mxu0 0
    %1635 = vmatprep.mubr.bf16.mxu0 0
    %1636 = vmatmul.mubr.bf16.gmra.mxu0 %v1598
    %v1637 = vpop.f32.mrf.mxu0
    %v1638 = vadd.f32 %v1584, %v1637
    %v1639 = vpop.f32.mrf.mxu0
    %v1640 = vpop.f32.mrf.mxu0
    %v1641 = vadd.f32 %v1584, %v1640
    %v1642 = vpop.f32.mrf.mxu0
    %1643 = vmatprep.mubr.bf16.mxu0 0
    %1644 = vmatmul.mubr.bf16.gmra.mxu0 %v1601
    %v1645 = vpop.f32.mrf.mxu0
    %v1646 = vadd.f32 %v1584, %v1645
    %v1647 = vpop.f32.mrf.mxu0
    %v1648 = vpop.f32.mrf.mxu0
    %v1649 = vadd.f32 %v1584, %v1648
    %v1650 = vpop.f32.mrf.mxu0
    %1651 = vdwg.mxu0
    %v1652 = vmul.f32 %v1638, %v1638
    %v1653 = vmul.f32 %v1641, %v1641
    %v1654 = vmul.f32 %v1646, %v1646
    %v1655 = vmul.f32 %v1649, %v1649
    %v1656 = vmul.f32 %v1638, %v1652
    %v1657 = vmul.f32 %v1641, %v1653
    %v1658 = vmul.f32 %v1646, %v1654
    %v1659 = vmul.f32 %v1649, %v1655
    %v1660 = vmul.f32 %v1656, 0.044715
    %v1661 = vmul.f32 %v1657, 0.044715
    %v1662 = vmul.f32 %v1658, 0.044715
    %v1663 = vmul.f32 %v1659, 0.044715
    %v1664 = vadd.f32 %v1638, %v1660
    %v1665 = vadd.f32 %v1641, %v1661
    %v1666 = vadd.f32 %v1646, %v1662
    %v1667 = vadd.f32 %v1649, %v1663
    %v1668 = vmul.f32 %v1664, 0.7978846
    %v1669 = vmul.f32 %v1665, 0.7978846
    %v1670 = vmul.f32 %v1666, 0.7978846
    %v1671 = vmul.f32 %v1667, 0.7978846
    %v1672 = vtanh.pop %v1668
    %v1673 = vtanh.pop %v1669
    %v1674 = vtanh.pop %v1670
    %v1675 = vtanh.pop %v1671
    %v1676 = vadd.f32 %v1672, 1.0
    %v1677 = vadd.f32 %v1673, 1.0
    %v1678 = vadd.f32 %v1674, 1.0
    %v1679 = vadd.f32 %v1675, 1.0
    %v1680 = vmul.f32 %v1676, 0.5
    %v1681 = vmul.f32 %v1677, 0.5
    %v1682 = vmul.f32 %v1678, 0.5
    %v1683 = vmul.f32 %v1679, 0.5
    %v1684 = vmul.f32 %v1638, %v1680
    %v1685 = vmul.f32 %v1641, %v1681
    %v1686 = vmul.f32 %v1646, %v1682
    %v1687 = vmul.f32 %v1649, %v1683
    %s1688 = scalar_lea.vmem %s5, 64
    %v1689 = vld [vmem:[%s1688] sm:$0xf]
    %v1690 = vld [vmem:[%s1688 + $0x4] sm:$0xf]
    %v1691 = vld [vmem:[%s1688 + $0x8] sm:$0xf]
    %v1692 = vld [vmem:[%s1688 + $0xc] sm:$0xf]
    %v1693 = vld [vmem:[%s1688 + $0x10] sm:$0xf]
    %v1694 = vld [vmem:[%s1688 + $0x14] sm:$0xf]
    %v1695 = vld [vmem:[%s1688 + $0x18] sm:$0xf]
    %v1696 = vld [vmem:[%s1688 + $0x1c] sm:$0xf]
    %v1697 = vld [vmem:[%s1688 + $0x20] sm:$0xf]
    %v1698 = vld [vmem:[%s1688 + $0x24] sm:$0xf]
    %v1699 = vld [vmem:[%s1688 + $0x28] sm:$0xf]
    %v1700 = vld [vmem:[%s1688 + $0x2c] sm:$0xf]
    %v1701 = vld [vmem:[%s1688 + $0x30] sm:$0xf]
    %v1702 = vld [vmem:[%s1688 + $0x34] sm:$0xf]
    %v1703 = vld [vmem:[%s1688 + $0x38] sm:$0xf]
    %v1704 = vld [vmem:[%s1688 + $0x3c] sm:$0xf]
    %v1705 = vpack.c.bf16 %v1685, %v1684
    %v1706 = vpack.c.bf16 %v1687, %v1686
    %v1723 = vunpack.c.l.b16 %v1689
    %v1724 = vunpack.c.l.b16 %v1690
    %v1725 = vunpack.c.l.b16 %v1691
    %v1726 = vunpack.c.l.b16 %v1692
    %v1727 = vunpack.c.l.b16 %v1693
    %v1728 = vunpack.c.l.b16 %v1694
    %v1729 = vunpack.c.l.b16 %v1695
    %v1730 = vunpack.c.l.b16 %v1696
    %v1731 = vunpack.c.l.b16 %v1697
    %v1732 = vunpack.c.l.b16 %v1698
    %v1733 = vunpack.c.l.b16 %v1699
    %v1734 = vunpack.c.l.b16 %v1700
    %v1735 = vunpack.c.l.b16 %v1701
    %v1736 = vunpack.c.l.b16 %v1702
    %v1737 = vunpack.c.l.b16 %v1703
    %v1738 = vunpack.c.l.b16 %v1704
    %v1739 = vpack.c.b16 %v1724, %v1723
    %v1740 = vpack.c.b16 %v1726, %v1725
    %v1741 = vpack.c.b16 %v1728, %v1727
    %v1742 = vpack.c.b16 %v1730, %v1729
    %v1743 = vpack.c.b16 %v1732, %v1731
    %v1744 = vpack.c.b16 %v1734, %v1733
    %v1745 = vpack.c.b16 %v1736, %v1735
    %v1746 = vpack.c.b16 %v1738, %v1737
    %1755 = vmatprep.subr.bf16.mxu0 0
    %1756 = vmatpush1.bf16.msra.mxu0 %v1746
    %1757 = vmatprep.subr.bf16.mxu0 0
    %1758 = vmatpush1.bf16.msra.mxu0 %v1745
    %1759 = vmatprep.subr.bf16.mxu0 0
    %1760 = vmatpush1.bf16.msra.mxu0 %v1744
    %1761 = vmatprep.subr.bf16.mxu0 0
    %1762 = vmatpush1.bf16.msra.mxu0 %v1743
    %1763 = vmatprep.subr.bf16.mxu0 0
    %1764 = vmatpush1.bf16.msra.mxu0 %v1742
    %1765 = vmatprep.subr.bf16.mxu0 0
    %1766 = vmatpush1.bf16.msra.mxu0 %v1741
    %1767 = vmatprep.subr.bf16.mxu0 0
    %1768 = vmatpush1.bf16.msra.mxu0 %v1740
    %1769 = vmatprep.subr.bf16.mxu0 0
    %1770 = vmatpush1.bf16.msra.mxu0 %v1739
    %1771 = vmatprep.subr.bf16.mxu0 0
    %1772 = vmatpush2.bf16.msra.mxu0 0
    %1773 = vmatprep.subr.bf16.mxu0 0
    %1774 = vmatpush2.bf16.msra.mxu0 0
    %1775 = vmatprep.subr.bf16.mxu0 0
    %1776 = vmatpush2.bf16.msra.mxu0 0
    %1777 = vmatprep.subr.bf16.mxu0 0
    %1778 = vmatpush2.bf16.msra.mxu0 0
    %1779 = vmatprep.subr.bf16.mxu0 0
    %1780 = vmatpush2.bf16.msra.mxu0 0
    %1781 = vmatprep.subr.bf16.mxu0 0
    %1782 = vmatpush2.bf16.msra.mxu0 0
    %1783 = vmatprep.subr.bf16.mxu0 0
    %1784 = vmatpush2.bf16.msra.mxu0 0
    %1785 = vmatprep.subr.bf16.mxu0 0
    %1786 = vmatpush2.bf16.msra.mxu0 0
    %1787 = vmatprep.mubr.bf16.mxu0 0
    %1788 = vmatmul.mubr.bf16.gmra.mxu0 %v1705
    %v1789 = vpop.f32.mrf.mxu0
    %v1790 = vadd.f32 0.0, %v1789
    %v1791 = vpop.f32.mrf.mxu0
    %v1792 = vpop.f32.mrf.mxu0
    %v1793 = vadd.f32 0.0, %v1792
    %v1794 = vpop.f32.mrf.mxu0
    %1795 = vmatprep.mubr.bf16.mxu0 0
    %1796 = vmatmul.mubr.bf16.gmra.mxu0 %v1706
    %v1797 = vpop.f32.mrf.mxu0
    %v1798 = vadd.f32 0.0, %v1797
    %v1799 = vpop.f32.mrf.mxu0
    %v1800 = vpop.f32.mrf.mxu0
    %v1801 = vadd.f32 0.0, %v1800
    %v1802 = vpop.f32.mrf.mxu0
    %1803 = vdwg.mxu0
    %v1804 = vadd.f32 %v1499, %v1790
    %v1805 = vadd.f32 %v1500, %v1793
    %v1806 = vadd.f32 %v1501, %v1798
    %v1807 = vadd.f32 %v1502, %v1801
    %v1808 = vld [vmem:[%s10 + $0x16] sm:$0x1]
    %v1809 = vlaneseq
    %v1810 = vshrl.u32 %v1809, 7
    %v1811 = vsub.s32 0, %v1810
    %v1812 = vrot.slane %v1808, %v1811
    %v1813 = vadd.f32 %v1804, %v1812
    %v1814 = vadd.f32 %v1805, %v1812
    %v1815 = vadd.f32 %v1806, %v1812
    %v1816 = vadd.f32 %v1807, %v1812
    %v1817 = vsel %vm175, %v1813, 0.0
    %1818 = vadd.xlane.f32.xlu0 %v1817
    %v1819 = vpop.xlane.xlu0 %1818
    %v1820 = vsel %vm175, %v1814, 0.0
    %1821 = vadd.xlane.f32.xlu0 %v1820
    %v1822 = vpop.xlane.xlu0 %1821
    %v1823 = vsel %vm175, %v1815, 0.0
    %1824 = vadd.xlane.f32.xlu0 %v1823
    %v1825 = vpop.xlane.xlu0 %1824
    %v1826 = vsel %vm175, %v1816, 0.0
    %1827 = vadd.xlane.f32.xlu0 %v1826
    %v1828 = vpop.xlane.xlu0 %1827
    %v1829 = vmul.f32 %v1819, %v188
    %v1830 = vmul.f32 %v1822, %v188
    %v1831 = vmul.f32 %v1825, %v188
    %v1832 = vmul.f32 %v1828, %v188
    %v1833 = vsub.f32 %v1813, %v1829
    %v1834 = vsub.f32 %v1814, %v1830
    %v1835 = vsub.f32 %v1815, %v1831
    %v1836 = vsub.f32 %v1816, %v1832
    %v1837 = vmul.f32 %v1833, %v1833
    %v1838 = vmul.f32 %v1834, %v1834
    %v1839 = vmul.f32 %v1835, %v1835
    %v1840 = vmul.f32 %v1836, %v1836
    %v1841 = vsel %vm175, %v1837, 0.0
    %1842 = vadd.xlane.f32.xlu0 %v1841
    %v1843 = vpop.xlane.xlu0 %1842
    %v1844 = vsel %vm175, %v1838, 0.0
    %1845 = vadd.xlane.f32.xlu0 %v1844
    %v1846 = vpop.xlane.xlu0 %1845
    %v1847 = vsel %vm175, %v1839, 0.0
    %1848 = vadd.xlane.f32.xlu0 %v1847
    %v1849 = vpop.xlane.xlu0 %1848
    %v1850 = vsel %vm175, %v1840, 0.0
    %1851 = vadd.xlane.f32.xlu0 %v1850
    %v1852 = vpop.xlane.xlu0 %1851
    %v1853 = vmul.f32 %v1843, %v188
    %v1854 = vmul.f32 %v1846, %v188
    %v1855 = vmul.f32 %v1849, %v188
    %v1856 = vmul.f32 %v1852, %v188
    %v1857 = vadd.f32 %v1853, 1e-05
    %v1858 = vadd.f32 %v1854, 1e-05
    %v1859 = vadd.f32 %v1855, 1e-05
    %v1860 = vadd.f32 %v1856, 1e-05
    %v1861 = vrsqrt.pop %v1857
    %v1862 = vrsqrt.pop %v1858
    %v1863 = vrsqrt.pop %v1859
    %v1864 = vrsqrt.pop %v1860
    %v1865 = vmul.f32 %v1833, %v1861
    %v1866 = vmul.f32 %v1834, %v1862
    %v1867 = vmul.f32 %v1835, %v1863
    %v1868 = vmul.f32 %v1836, %v1864
    %v1869 = vld [vmem:[%s10 + $0xa] sm:$0x1]
    %v1870 = vlaneseq
    %v1871 = vshrl.u32 %v1870, 7
    %v1872 = vsub.s32 0, %v1871
    %v1873 = vrot.slane %v1869, %v1872
    %v1874 = vmul.f32 %v1865, %v1873
    %v1875 = vmul.f32 %v1866, %v1873
    %v1876 = vmul.f32 %v1867, %v1873
    %v1877 = vmul.f32 %v1868, %v1873
    %v1878 = vld [vmem:[%s10 + $0xb] sm:$0x1]
    %v1879 = vlaneseq
    %v1880 = vshrl.u32 %v1879, 7
    %v1881 = vsub.s32 0, %v1880
    %v1882 = vrot.slane %v1878, %v1881
    %v1883 = vadd.f32 %v1874, %v1882
    %v1884 = vadd.f32 %v1875, %v1882
    %v1885 = vadd.f32 %v1876, %v1882
    %v1886 = vadd.f32 %v1877, %v1882
    %v1887 = vld [vmem:[%s7] sm:$0xf]
    %v1888 = vld [vmem:[%s7 + $0x4] sm:$0xf]
    %v1889 = vld [vmem:[%s7 + $0x8] sm:$0xf]
    %v1890 = vld [vmem:[%s7 + $0xc] sm:$0xf]
    %v1891 = vpack.c.bf16 %v1884, %v1883
    %v1892 = vpack.c.bf16 %v1886, %v1885
    %v1893 = vld [vmem:[%s10 + $0x17] sm:$0x1]
    %v1894 = vlaneseq
    %v1895 = vshrl.u32 %v1894, 7
    %v1896 = vsub.s32 0, %v1895
    %v1897 = vrot.slane %v1893, %v1896
    %v1902 = vunpack.c.l.b16 %v1887
    %v1903 = vunpack.c.l.b16 %v1888
    %v1904 = vunpack.c.l.b16 %v1889
    %v1905 = vunpack.c.l.b16 %v1890
    %v1906 = vpack.c.b16 %v1903, %v1902
    %v1907 = vpack.c.b16 %v1905, %v1904
    %v1911 = vsel %vm175, %v1891, 0
    %v1914 = vsel %vm175, %v1892, 0
    %1916 = vmatprep.subr.bf16.mxu0 0
    %1917 = vmatpush1.bf16.msra.mxu0 0
    %1918 = vmatprep.subr.bf16.mxu0 0
    %1919 = vmatpush1.bf16.msra.mxu0 0
    %1920 = vmatprep.subr.bf16.mxu0 0
    %1921 = vmatpush1.bf16.msra.mxu0 0
    %1922 = vmatprep.subr.bf16.mxu0 0
    %1923 = vmatpush1.bf16.msra.mxu0 0
    %1924 = vmatprep.subr.bf16.mxu0 0
    %1925 = vmatpush1.bf16.msra.mxu0 0
    %1926 = vmatprep.subr.bf16.mxu0 0
    %1927 = vmatpush1.bf16.msra.mxu0 0
    %1928 = vmatprep.subr.bf16.mxu0 0
    %1929 = vmatpush1.bf16.msra.mxu0 %v1907
    %1930 = vmatprep.subr.bf16.mxu0 0
    %1931 = vmatpush1.bf16.msra.mxu0 %v1906
    %1932 = vmatprep.subr.bf16.mxu0 0
    %1933 = vmatpush2.bf16.msra.mxu0 0
    %1934 = vmatprep.subr.bf16.mxu0 0
    %1935 = vmatpush2.bf16.msra.mxu0 0
    %1936 = vmatprep.subr.bf16.mxu0 0
    %1937 = vmatpush2.bf16.msra.mxu0 0
    %1938 = vmatprep.subr.bf16.mxu0 0
    %1939 = vmatpush2.bf16.msra.mxu0 0
    %1940 = vmatprep.subr.bf16.mxu0 0
    %1941 = vmatpush2.bf16.msra.mxu0 0
    %1942 = vmatprep.subr.bf16.mxu0 0
    %1943 = vmatpush2.bf16.msra.mxu0 0
    %1944 = vmatprep.subr.bf16.mxu0 0
    %1945 = vmatpush2.bf16.msra.mxu0 0
    %1946 = vmatprep.subr.bf16.mxu0 0
    %1947 = vmatpush2.bf16.msra.mxu0 0
    %1948 = vmatprep.mubr.bf16.mxu0 0
    %1949 = vmatmul.mubr.bf16.gmra.mxu0 %v1911
    %v1950 = vpop.f32.mrf.mxu0
    %v1951 = vadd.f32 %v1897, %v1950
    %v1952 = vpop.f32.mrf.mxu0
    %v1953 = vpop.f32.mrf.mxu0
    %v1954 = vadd.f32 %v1897, %v1953
    %v1955 = vpop.f32.mrf.mxu0
    %1956 = vmatprep.mubr.bf16.mxu0 0
    %1957 = vmatmul.mubr.bf16.gmra.mxu0 %v1914
    %v1958 = vpop.f32.mrf.mxu0
    %v1959 = vadd.f32 %v1897, %v1958
    %v1960 = vpop.f32.mrf.mxu0
    %v1961 = vpop.f32.mrf.mxu0
    %v1962 = vadd.f32 %v1897, %v1961
    %v1963 = vpop.f32.mrf.mxu0
    %1964 = vdwg.mxu0
    %1965 = vst.msk [vmem:[%s13] sm:$0xff] %vm97, %v1951
    %1966 = vst.msk [vmem:[%s13 + $0x8] sm:$0xff] %vm97, %v1954
    %1967 = vst.msk [vmem:[%s13 + $0x10] sm:$0xff] %vm97, %v1959
    %1968 = vst.msk [vmem:[%s13 + $0x18] sm:$0xff] %vm97, %v1962
    // Predicated region
    $region46: #{image_renderer_forward.1} parent=1 // pred_check
      _
    $region47: #{image_renderer_forward.1} parent=1 // pred_check_branch
      %1970 = sbr.rel (0) target = $region49
    $region48: #{image_renderer_forward.1} parent=1 // pred_region
      _
    $region49: #{image_renderer_forward.1} parent=1 // pred_fallthru
      _
    // Predicated region
    $region50: #{image_renderer_forward.1} parent=1 // pred_check
      _
    $region51: #{image_renderer_forward.1} parent=1 // pred_check_branch
      %1972 = sbr.rel (0) target = $region53
    $region52: #{image_renderer_forward.1} parent=1 // pred_region
      %s1974 = ssub.s32 256, 256
      %1975 = vsyncadd [#allocation3], %s1974
      %s1976 = sshll.u32 [#allocation2], 4
      %s1977 = int_to_ptr.vmem [resolvable:$true] %s1976
      %1982 = dma.vmem_to_hbm [thread:$0]  %s1977, 256, %s12, [#allocation3], 128, 128, 8
    $region53: #{image_renderer_forward.1} parent=1 // pred_fallthru
      _
    // Predicated region
    $region54: #{image_renderer_forward.1} parent=1 // pred_check
      _
    $region55: #{image_renderer_forward.1} parent=1 // pred_check_branch
      %1984 = sbr.rel (0) target = $region57
    $region56: #{image_renderer_forward.1} parent=1 // pred_region
      _
    $region57: #{image_renderer_forward.1} parent=1 // pred_fallthru
      _
    // Predicated region
    $region58: #{image_renderer_forward.1} parent=1 // pred_check
      _
    $region59: #{image_renderer_forward.1} parent=1 // pred_check_branch
      %1986 = sbr.rel (0) target = $region61
    $region60: #{image_renderer_forward.1} parent=1 // pred_region
      _
    $region61: #{image_renderer_forward.1} parent=1 // pred_fallthru
      _
    // Predicated region
    $region62: #{image_renderer_forward.1} parent=1 // pred_check
      _
    $region63: #{image_renderer_forward.1} parent=1 // pred_check_branch
      %1988 = sbr.rel (0) target = $region65
    $region64: #{image_renderer_forward.1} parent=1 // pred_region
      %1989 = dma.done [#allocation3], 256
    $region65: #{image_renderer_forward.1} parent=1 // pred_fallthru
      _
    // Predicated region
    $region66: #{image_renderer_forward.1} parent=1 // pred_check
      _
    $region67: #{image_renderer_forward.1} parent=1 // pred_check_branch
      %1991 = sbr.rel (0) target = $region69
    $region68: #{image_renderer_forward.1} parent=1 // pred_region
      _
    $region69: #{image_renderer_forward.1} parent=1 // pred_fallthru
      _
    %1992 = vsyncpa [#allocation3], 1

</llo_original>
